<compile_context>
chip_gen: v7x
topology: tpu7x:2x2x1
jax: 0.10.0
libtpu: 0.0.40
codegen_flags: <defaults>
</compile_context>

<pallas_src>
import functools

import jax
import jax.numpy as jnp
import numpy as np
from jax import lax
from jax.experimental import pallas as pl
from jax.experimental.pallas import tpu as pltpu

LANE = 128
SUBLANE = 8

# PyTorch gate order is (i, f, g, o); the kernel uses (i, f, o, g) so one
# contiguous sigmoid covers the first 3*Hp lanes and tanh the last Hp block.
_GATE_ORDER = [0, 1, 3, 2]


def _round_up(x, m):
    return (x + m - 1) // m * m


# ----------------------------------------------------------------------------
# Capability probe: single-buffered resident inputs (pl.Buffered(1)).
# ----------------------------------------------------------------------------
_BUFFERED_ONE_OK = False


def _probe_buffered_one():
    """Probe whether pipeline_mode=pl.Buffered(1) is accepted by this build.

    Must be called OUTSIDE jit (it runs a tiny pallas_call eagerly).  On
    failure we silently fall back to default double-buffered weight specs
    (correct, just 2x weight VMEM).
    """
    global _BUFFERED_ONE_OK
    try:
        spec = pl.BlockSpec((8, 128), lambda i: (0, 0),
                            pipeline_mode=pl.Buffered(1))

        def _k(x_ref, o_ref):
            o_ref[...] = x_ref[...] + 1.0

        out = pl.pallas_call(
            _k,
            out_shape=jax.ShapeDtypeStruct((8, 128), jnp.float32),
            grid=(1,),
            in_specs=[spec],
            out_specs=pl.BlockSpec((8, 128), lambda i: (0, 0)),
        )(jnp.zeros((8, 128), jnp.float32))
        jax.block_until_ready(out)
        _BUFFERED_ONE_OK = True
    except Exception:
        _BUFFERED_ONE_OK = False
    return _BUFFERED_ONE_OK


def _resident_spec(shape, index_map):
    """BlockSpec for weights/bias with a constant index_map (DMA'd once)."""
    if _BUFFERED_ONE_OK:
        return pl.BlockSpec(shape, index_map, pipeline_mode=pl.Buffered(1))
    return pl.BlockSpec(shape, index_map)


def _physical_vmem_bytes():
    try:
        return int(getattr(pltpu.get_tpu_info(), "vmem_capacity_bytes",
                           128 * 1024 * 1024))
    except Exception:
        return 128 * 1024 * 1024


# ----------------------------------------------------------------------------
# One LSTM layer.  Grid = (batch_tiles, time_blocks); h/c carried in VMEM
# scratch across the sequential time-block axis.
# ----------------------------------------------------------------------------
def lstm_layer(x, wih_t, whh_t, b, head_w=None, head_b=None,
               *, block_t=16, block_b=256):
    """One unidirectional LSTM layer on lane-padded operands.

    x:      (T, B, Hin_p) bf16, Hin_p % 128 == 0 (padded hidden cols are zero)
    wih_t:  (Hin_p, 4*Hp) bf16, gate blocks (i,f,o,g), each lane-aligned
    whh_t:  (Hp, 4*Hp)    bf16
    b:      (1, 4*Hp)     f32, combined b_ih + b_hh, gate blocks lane-aligned
    head_w: (Hp, Op) f32, head_b: (1, Op) f32
      head given   -> returns sigmoid(h_last @ head_w + head_b): (B, Op) f32;
                      the (dead) per-step sequence is never written to HBM.
      head is None -> returns (out_seq (T, B, Hp) in x.dtype, h_last (B, Hp)).
    """
    T, B, Hin = x.shape
    Hp, fourHp = whh_t.shape

    # --- pad-to-tile (never shrink tiles to awkward divisors) ---------------
    Bp8 = _round_up(max(B, SUBLANE), SUBLANE)
    Bt = Bp8 if Bp8 <= block_b else block_b
    Bp = _round_up(Bp8, Bt)
    Tt = T if T <= block_t else block_t
    Tp = _round_up(T, Tt)
    if (Tp, Bp) != (T, B):
        x = jnp.pad(x, ((0, Tp - T), (0, Bp - B), (0, 0)))
    need_mask = Tp != T          # padded tail timesteps must not update h/c
    grid = (Bp // Bt, Tp // Tt)

    # --- VMEM budget (explicit scoped limit, capped by physical VMEM) -------
    est = (2 * Tt * Bt * Hin * x.dtype.itemsize              # x blocks (x2 buf)
           + (Hin + Hp) * fourHp * wih_t.dtype.itemsize      # resident weights
           + fourHp * 4                                      # bias
           + Tt * Bt * fourHp * 4                            # xp_sc scratch
           + 2 * Bt * Hp * 4)                                # h/c carries
    if head_w is None:
        est += 2 * Tt * Bt * Hp * x.dtype.itemsize + 2 * Bt * Hp * 4
    else:
        op = head_w.shape[1]
        est += Hp * op * 4 + op * 4 + 2 * Bt * op * 4
    vmem_limit = int(min(0.9 * _physical_vmem_bytes(),
                         max(32 * 1024 * 1024, 2 * est)))

    # --- kernel bodies -------------------------------------------------------
    def _recurrence(x_ref, wih_ref, whh_ref, b_ref, h_sc, c_sc, xp_sc, out_ref):
        @pl.when(pl.program_id(1) == 0)
        def _():
            h_sc[...] = jnp.zeros_like(h_sc)
            c_sc[...] = jnp.zeros_like(c_sc)

        # Hoisted input projection: one bf16 MXU GEMM with M = Tt*Bt rows,
        # combined bias folded in once per time block (not per step).
        # TODO(synk): double-buffer xp_sc and prefetch block tb+1's x@W_ih so
        # this GEMM overlaps with the EUP/VPU-bound recurrence below.
        x2d = x_ref[...].reshape(Tt * Bt, Hin)
        xp_sc[...] = (jnp.dot(x2d, wih_ref[...],
                              preferred_element_type=jnp.float32) + b_ref[...])

        t_base = pl.program_id(1) * Tt

        def step(t, carry):
            h, c = carry
            row = pl.multiple_of(t * Bt, Bt)
            # TODO(synk): keep W_hh weight-stationary across the unrolled
            # steps via pltpu.matmul_push_rhs/acc_lhs/pop for small Hp.
            gates = xp_sc[pl.ds(row, Bt), :] + jnp.dot(
                h.astype(whh_ref.dtype), whh_ref[...],
                preferred_element_type=jnp.float32)
            # Gate order (i, f, o, g): one contiguous sigmoid over 3*Hp lanes.
            sig = jax.nn.sigmoid(gates[:, :3 * Hp])
            i_g = sig[:, 0 * Hp:1 * Hp]
            f_g = sig[:, 1 * Hp:2 * Hp]
            o_g = sig[:, 2 * Hp:3 * Hp]
            g_g = jnp.tanh(gates[:, 3 * Hp:4 * Hp])
            c_new = f_g * c + i_g * g_g
            h_new = o_g * jnp.tanh(c_new)
            if need_mask:
                valid = (t_base + t) < T          # T is a static Python int
                h_new = jnp.where(valid, h_new, h)
                c_new = jnp.where(valid, c_new, c)
            if out_ref is not None:
                out_ref[t] = h_new.astype(out_ref.dtype)
            return h_new, c_new

        h, c = lax.fori_loop(0, Tt, step, (h_sc[...], c_sc[...]), unroll=True)
        h_sc[...] = h
        c_sc[...] = c
        return h

    def seq_kernel(x_ref, wih_ref, whh_ref, b_ref, out_ref, hlast_ref,
                   h_sc, c_sc, xp_sc):
        h = _recurrence(x_ref, wih_ref, whh_ref, b_ref, h_sc, c_sc, xp_sc,
                        out_ref)

        @pl.when(pl.program_id(1) == pl.num_programs(1) - 1)
        def _():
            hlast_ref[...] = h.astype(hlast_ref.dtype)

    def head_kernel(x_ref, wih_ref, whh_ref, b_ref, wlin_ref, blin_ref,
                    scores_ref, h_sc, c_sc, xp_sc):
        # No out_seq stores at all: the sequence is dead in this model, and
        # XLA cannot DCE a single output of the custom call.
        h = _recurrence(x_ref, wih_ref, whh_ref, b_ref, h_sc, c_sc, xp_sc,
                        None)

        # Fused Linear + Sigmoid on the final hidden state (already resident).
        @pl.when(pl.program_id(1) == pl.num_programs(1) - 1)
        def _():
            z = jnp.dot(h, wlin_ref[...],
                        preferred_element_type=jnp.float32) + blin_ref[...]
            scores_ref[...] = jax.nn.sigmoid(z).astype(scores_ref.dtype)

    # --- specs ---------------------------------------------------------------
    in_specs = [
        pl.BlockSpec((Tt, Bt, Hin), lambda bt, tb: (tb, bt, 0)),
        _resident_spec((Hin, fourHp), lambda bt, tb: (0, 0)),
        _resident_spec((Hp, fourHp), lambda bt, tb: (0, 0)),
        _resident_spec((1, fourHp), lambda bt, tb: (0, 0)),
    ]
    scratch_shapes = [
        pltpu.VMEM((Bt, Hp), jnp.float32),            # h carry
        pltpu.VMEM((Bt, Hp), jnp.float32),            # c carry
        pltpu.VMEM((Tt * Bt, fourHp), jnp.float32),   # hoisted input projection
    ]
    compiler_params = pltpu.CompilerParams(
        # TODO(synk): verify in a trace that the "parallel" batch axis really
        # shards across the two v7x TensorCores; if not, switch to
        # pltpu.CORE_PARALLEL / pl.core_map.
        dimension_semantics=("parallel", "arbitrary"),
        vmem_limit_bytes=vmem_limit)

    if head_w is None:
        kernel = seq_kernel
        out_shape = (jax.ShapeDtypeStruct((Tp, Bp, Hp), x.dtype),
                     jax.ShapeDtypeStruct((Bp, Hp), jnp.float32))
        out_specs = [pl.BlockSpec((Tt, Bt, Hp), lambda bt, tb: (tb, bt, 0)),
                     pl.BlockSpec((Bt, Hp), lambda bt, tb: (bt, 0))]
        args = (x, wih_t, whh_t, b)
    else:
        Op = head_w.shape[1]
        kernel = head_kernel
        in_specs = in_specs + [_resident_spec((Hp, Op), lambda bt, tb: (0, 0)),
                               _resident_spec((1, Op), lambda bt, tb: (0, 0))]
        out_shape = jax.ShapeDtypeStruct((Bp, Op), jnp.float32)
        out_specs = pl.BlockSpec((Bt, Op), lambda bt, tb: (bt, 0))
        args = (x, wih_t, whh_t, b, head_w, head_b)

    out = pl.pallas_call(
        kernel,
        out_shape=out_shape,
        grid_spec=pltpu.PrefetchScalarGridSpec(
            num_scalar_prefetch=0,
            grid=grid,
            in_specs=in_specs,
            out_specs=out_specs,
            scratch_shapes=scratch_shapes),
        compiler_params=compiler_params,
    )(*args)

    if head_w is None:
        out_seq, h_last = out
        return out_seq[:T, :B], h_last[:B]
    return out[:B]


# ----------------------------------------------------------------------------
# Parameter padding helpers (zero padding is numerically exact: padded gate
# pre-activations are 0 -> i=f=o=0.5, g=0, so padded h/c stay identically 0).
# ----------------------------------------------------------------------------
def _pad_gate_weight(w, hin_p, hp):
    """PyTorch (4H, Hin) gate weight -> (Hin_p, 4*Hp): transposed for
    row-major MXU dots, gate blocks reordered to (i, f, o, g), each padded to
    its own 128-lane-aligned column group."""
    four_h, hin = w.shape
    h = four_h // 4
    w_t = jnp.transpose(w).reshape(hin, 4, h)[:, _GATE_ORDER, :]
    w_t = jnp.pad(w_t, ((0, hin_p - hin), (0, 0), (0, hp - h)))
    return w_t.reshape(hin_p, 4 * hp)


def _pad_gate_bias(b, hp):
    h = b.shape[0] // 4
    b4 = b.reshape(4, h)[_GATE_ORDER, :]
    return jnp.pad(b4, ((0, 0), (0, hp - h))).reshape(1, 4 * hp)


# ----------------------------------------------------------------------------
# Parameters + full forward (matches the PyTorch module's semantics; the
# module consumes h_last[0] == layer 0's final hidden state).
# ----------------------------------------------------------------------------
def init_params(key, vocab_size, hidden_size, output_size, num_layers):
    params = {}
    k_emb, k_lin_w, k_lin_b, k_rest = jax.random.split(key, 4)
    scale = 1.0 / jnp.sqrt(jnp.float32(hidden_size))

    params["emb"] = jax.random.normal(
        k_emb, (vocab_size, hidden_size), jnp.float32)

    layer_keys = jax.random.split(k_rest, num_layers * 4)
    for l in range(num_layers):
        in_size = hidden_size  # input_size == hidden_size for every layer here
        kw0, kw1, kb0, kb1 = layer_keys[4 * l:4 * l + 4]
        params[f"w_ih_{l}"] = jax.random.uniform(
            kw0, (4 * hidden_size, in_size), jnp.float32, -scale, scale)
        params[f"w_hh_{l}"] = jax.random.uniform(
            kw1, (4 * hidden_size, hidden_size), jnp.float32, -scale, scale)
        params[f"b_ih_{l}"] = jax.random.uniform(
            kb0, (4 * hidden_size,), jnp.float32, -scale, scale)
        params[f"b_hh_{l}"] = jax.random.uniform(
            kb1, (4 * hidden_size,), jnp.float32, -scale, scale)

    params["w_lin"] = jax.random.uniform(
        k_lin_w, (output_size, hidden_size), jnp.float32, -scale, scale)
    params["b_lin"] = jax.random.uniform(
        k_lin_b, (output_size,), jnp.float32, -scale, scale)
    return params


@functools.partial(jax.jit, static_argnames=("num_layers",))
def lstm_model_forward(params, input_seq, num_layers):
    """input_seq: (T, B) int32 token ids. Returns sigmoid(lin(h_last[0]))."""
    T, B = input_seq.shape
    H = params["emb"].shape[1]
    O = params["w_lin"].shape[0]
    Hp = _round_up(H, LANE)
    Op = _round_up(O, LANE)

    # Embedding lookup (gather) stays in plain JAX; padded hidden columns are
    # zero so padding is numerically exact inside the LSTM kernel.
    emb_p = jnp.pad(params["emb"].astype(jnp.float32), ((0, 0), (0, Hp - H)))
    x = jnp.take(emb_p, input_seq, axis=0).astype(jnp.bfloat16)   # (T, B, Hp)

    # Head (Linear + Sigmoid) operands, fused into layer 0's epilogue.
    w_lin_p = jnp.pad(jnp.transpose(params["w_lin"]).astype(jnp.float32),
                      ((0, Hp - H), (0, Op - O)))
    b_lin_p = jnp.pad(params["b_lin"].astype(jnp.float32),
                      (0, Op - O)).reshape(1, Op)

    wih = _pad_gate_weight(params["w_ih_0"], Hp, Hp).astype(jnp.bfloat16)
    whh = _pad_gate_weight(params["w_hh_0"], Hp, Hp).astype(jnp.bfloat16)
    bias = _pad_gate_bias(params["b_ih_0"] + params["b_hh_0"], Hp)

    # The PyTorch module consumes only h_last[0] (layer 0's final hidden
    # state), so layers 1..num_layers-1 never influence the returned scores
    # (XLA would DCE them anyway).  Run layer 0 alone with the head fused and
    # the dead per-step sequence writeback elided (head-only kernel variant).
    del num_layers
    scores = lstm_layer(x, wih, whh, bias, head_w=w_lin_p, head_b=b_lin_p)
    return scores[:, :O]


# ----------------------------------------------------------------------------
# Pure-JAX reference (lax.scan) for correctness checking.
# ----------------------------------------------------------------------------
def lstm_model_reference(params, input_seq, num_layers):
    x = jnp.take(params["emb"], input_seq, axis=0)             # (T, B, H)
    _, B, H = x.shape
    h0_last = None
    for l in range(num_layers):
        w_ih = params[f"w_ih_{l}"]
        w_hh = params[f"w_hh_{l}"]
        bias = params[f"b_ih_{l}"] + params[f"b_hh_{l}"]

        def step(carry, xt, w_ih=w_ih, w_hh=w_hh, bias=bias):
            h, c = carry
            gates = (jnp.dot(xt, w_ih.T, precision=lax.Precision.HIGHEST)
                     + jnp.dot(h, w_hh.T, precision=lax.Precision.HIGHEST)
                     + bias)
            i_g, f_g, g_g, o_g = jnp.split(gates, 4, axis=-1)
            c = jax.nn.sigmoid(f_g) * c + jax.nn.sigmoid(i_g) * jnp.tanh(g_g)
            h = jax.nn.sigmoid(o_g) * jnp.tanh(c)
            return (h, c), h

        init = (jnp.zeros((B, H), jnp.float32), jnp.zeros((B, H), jnp.float32))
        (h_last, _), ys = lax.scan(step, init, x)
        if l == 0:
            h0_last = h_last
        x = ys
    z = jnp.dot(h0_last, params["w_lin"].T,
                precision=lax.Precision.HIGHEST) + params["b_lin"]
    return jax.nn.sigmoid(z)


if __name__ == "__main__":
    vocab_size, hidden_size, output_size, num_layers = 50, 32, 8, 2
    T, B = 8, 2

    # Must run outside jit: enables single-buffered resident weights when the
    # installed Pallas build supports pipeline_mode=pl.Buffered(1).
    _probe_buffered_one()

    key = jax.random.PRNGKey(0)
    k_params, k_tokens = jax.random.split(key)
    params = init_params(k_params, vocab_size, hidden_size,
                         output_size, num_layers)
    input_seq = jax.random.randint(k_tokens, (T, B), 0, vocab_size,
                                   dtype=jnp.int32)

    out = lstm_model_forward(params, input_seq, num_layers)
    jax.block_until_ready(out)

    assert out.shape == (B, output_size)
    assert bool(jnp.all(jnp.isfinite(out)))

    ref = lstm_model_reference(params, input_seq, num_layers)
    np.testing.assert_allclose(np.asarray(out), np.asarray(ref),
                               atol=2e-2, rtol=2e-2)
    print("KERNEL_OK")
</pallas_src>

<mosaic_0001>
module attributes {stable_mosaic.version = 11 : i64} {
  func.func @_k(%arg0: i32, %arg1: memref<8x128xf32, #tpu.memory_space<vmem>>, %arg2: memref<8x128xf32, #tpu.memory_space<vmem>>) attributes {dimension_semantics = [#tpu.dimension_semantics<arbitrary>], iteration_bounds = array<i64: 1>, scalar_prefetch = 0 : i64, scratch_operands = 0 : i64, tpu.core_type = #tpu.core_type<tc>, window_params = [{pipeline_mode = #tpu.pipeline_mode<synchronous>, transform_indices = @transform_0, window_bounds = array<i64: 8, 128>}, {pipeline_mode = #tpu.pipeline_mode<synchronous>, transform_indices = @transform_1, window_bounds = array<i64: 8, 128>}]} {
    %c0 = arith.constant 0 : index
    %c0_0 = arith.constant 0 : index
    %0 = vector.load %arg1[%c0, %c0_0] : memref<8x128xf32, #tpu.memory_space<vmem>>, vector<8x128xf32>
    %cst = arith.constant 1.000000e+00 : f32
    %1 = vector.broadcast %cst : f32 to vector<8x128xf32>
    %2 = arith.addf %0, %1 : vector<8x128xf32>
    %c0_1 = arith.constant 0 : index
    %c0_2 = arith.constant 0 : index
    %3 = vector.load %arg2[%c0_1, %c0_2] : memref<8x128xf32, #tpu.memory_space<vmem>>, vector<8x128xf32>
    tpu.vector_store %arg2[%c0_1, %c0_2], %2 {strides = array<i32>} : memref<8x128xf32, #tpu.memory_space<vmem>>, vector<8x128xf32>,
    return
  }
  func.func @transform_0(%arg0: i32) -> (i32, i32) {
    %c0_i32 = arith.constant 0 : i32
    %c0_i32_0 = arith.constant 0 : i32
    %c0_i32_1 = arith.constant 0 : i32
    return %c0_i32, %c0_i32_0 : i32, i32
  }
  func.func @transform_1(%arg0: i32) -> (i32, i32) {
    %c0_i32 = arith.constant 0 : i32
    %c0_i32_0 = arith.constant 0 : i32
    %c0_i32_1 = arith.constant 0 : i32
    return %c0_i32, %c0_i32_0 : i32, i32
  }
}

module attributes {stable_mosaic.version = 11 : i64} {
  func.func @head_kernel(%arg0: i32, %arg1: i32, %arg2: memref<8x8x128xbf16, #tpu.memory_space<vmem>>, %arg3: memref<128x512xbf16, #tpu.memory_space<vmem>>, %arg4: memref<128x512xbf16, #tpu.memory_space<vmem>>, %arg5: memref<1x512xf32, #tpu.memory_space<vmem>>, %arg6: memref<128x128xf32, #tpu.memory_space<vmem>>, %arg7: memref<1x128xf32, #tpu.memory_space<vmem>>, %arg8: memref<8x128xf32, #tpu.memory_space<vmem>>, %arg9: memref<8x128xf32, #tpu.memory_space<vmem>>, %arg10: memref<8x128xf32, #tpu.memory_space<vmem>>, %arg11: memref<64x512xf32, #tpu.memory_space<vmem>>) attributes {dimension_semantics = [#tpu.dimension_semantics<parallel>, #tpu.dimension_semantics<arbitrary>], iteration_bounds = array<i64: 1, 1>, scalar_prefetch = 0 : i64, scratch_operands = 3 : i64, tpu.core_type = #tpu.core_type<tc>, window_params = [{transform_indices = @transform_0, window_bounds = array<i64: 8, 8, 128>}, {pipeline_mode = #tpu.pipeline_mode<synchronous>, transform_indices = @transform_1, window_bounds = array<i64: 128, 512>}, {pipeline_mode = #tpu.pipeline_mode<synchronous>, transform_indices = @transform_2, window_bounds = array<i64: 128, 512>}, {pipeline_mode = #tpu.pipeline_mode<synchronous>, transform_indices = @transform_3, window_bounds = array<i64: 1, 512>}, {pipeline_mode = #tpu.pipeline_mode<synchronous>, transform_indices = @transform_4, window_bounds = array<i64: 128, 128>}, {pipeline_mode = #tpu.pipeline_mode<synchronous>, transform_indices = @transform_5, window_bounds = array<i64: 1, 128>}, {transform_indices = @transform_6, window_bounds = array<i64: 8, 128>}]} {
    %c0_i32 = arith.constant 0 : i32
    %0 = arith.cmpi eq, %arg1, %c0_i32 : i32
    %1 = arith.extui %0 : i1 to i32
    %c0_i32_0 = arith.constant 0 : i32
    %2 = arith.cmpi ne, %1, %c0_i32_0 : i32
    scf.if %2 {
      %cst_68 = arith.constant 0.000000e+00 : f32
      %210 = vector.broadcast %cst_68 : f32 to vector<8x128xf32>
      %c0_69 = arith.constant 0 : index
      %c0_70 = arith.constant 0 : index
      %211 = vector.load %arg9[%c0_69, %c0_70] : memref<8x128xf32, #tpu.memory_space<vmem>>, vector<8x128xf32>
      tpu.vector_store %arg9[%c0_69, %c0_70], %210 {strides = array<i32>} : memref<8x128xf32, #tpu.memory_space<vmem>>, vector<8x128xf32>,
      %cst_71 = arith.constant 0.000000e+00 : f32
      %212 = vector.broadcast %cst_71 : f32 to vector<8x128xf32>
      %c0_72 = arith.constant 0 : index
      %c0_73 = arith.constant 0 : index
      %213 = vector.load %arg10[%c0_72, %c0_73] : memref<8x128xf32, #tpu.memory_space<vmem>>, vector<8x128xf32>
      tpu.vector_store %arg10[%c0_72, %c0_73], %212 {strides = array<i32>} : memref<8x128xf32, #tpu.memory_space<vmem>>, vector<8x128xf32>,
    } else {
    }
    %c0 = arith.constant 0 : index
    %c0_1 = arith.constant 0 : index
    %c0_2 = arith.constant 0 : index
    %3 = vector.load %arg2[%c0, %c0_1, %c0_2] : memref<8x8x128xbf16, #tpu.memory_space<vmem>>, vector<8x8x128xbf16>
    %4 = vector.shape_cast %3 : vector<8x8x128xbf16> to vector<64x128xbf16>
    %c0_3 = arith.constant 0 : index
    %c0_4 = arith.constant 0 : index
    %5 = vector.load %arg3[%c0_3, %c0_4] : memref<128x512xbf16, #tpu.memory_space<vmem>>, vector<128x512xbf16>
    %cst = arith.constant dense<0.000000e+00> : vector<64x512xf32>
    %6 = tpu.matmul %4, %5, %cst {dimension_numbers = #tpu.dot_dimension_numbers<[1], [0], [0], [1], [0, 0, 1, 1], [], []>} : vector<64x128xbf16>, vector<128x512xbf16>, vector<64x512xf32> -> vector<64x512xf32>
    %c0_5 = arith.constant 0 : index
    %c0_6 = arith.constant 0 : index
    %7 = vector.load %arg5[%c0_5, %c0_6] : memref<1x512xf32, #tpu.memory_space<vmem>>, vector<1x512xf32>
    %8 = vector.broadcast %7 : vector<1x512xf32> to vector<64x512xf32>
    %9 = arith.addf %6, %8 : vector<64x512xf32>
    %c0_7 = arith.constant 0 : index
    %c0_8 = arith.constant 0 : index
    %10 = vector.load %arg11[%c0_7, %c0_8] : memref<64x512xf32, #tpu.memory_space<vmem>>, vector<64x512xf32>
    tpu.vector_store %arg11[%c0_7, %c0_8], %9 {strides = array<i32>} : memref<64x512xf32, #tpu.memory_space<vmem>>, vector<64x512xf32>,
    %c0_9 = arith.constant 0 : index
    %c0_10 = arith.constant 0 : index
    %11 = vector.load %arg9[%c0_9, %c0_10] : memref<8x128xf32, #tpu.memory_space<vmem>>, vector<8x128xf32>
    %c0_11 = arith.constant 0 : index
    %c0_12 = arith.constant 0 : index
    %12 = vector.load %arg10[%c0_11, %c0_12] : memref<8x128xf32, #tpu.memory_space<vmem>>, vector<8x128xf32>
    %c0_i32_13 = arith.constant 0 : i32
    %c8_i32 = arith.constant 8 : i32
    %13 = arith.muli %c0_i32_13, %c8_i32 : i32
    %14 = tpu.assume_multiple %13, 8 : i32
    %15 = arith.index_cast %14 : i32 to index
    %c0_14 = arith.constant 0 : index
    %16 = vector.load %arg11[%15, %c0_14] : memref<64x512xf32, #tpu.memory_space<vmem>>, vector<8x512xf32>
    %17 = arith.truncf %11 : vector<8x128xf32> to vector<8x128xbf16>
    %c0_15 = arith.constant 0 : index
    %c0_16 = arith.constant 0 : index
    %18 = vector.load %arg4[%c0_15, %c0_16] : memref<128x512xbf16, #tpu.memory_space<vmem>>, vector<128x512xbf16>
    %cst_17 = arith.constant dense<0.000000e+00> : vector<8x512xf32>
    %19 = tpu.matmul %17, %18, %cst_17 {dimension_numbers = #tpu.dot_dimension_numbers<[1], [0], [0], [1], [0, 0, 1, 1], [], []>} : vector<8x128xbf16>, vector<128x512xbf16>, vector<8x512xf32> -> vector<8x512xf32>
    %20 = arith.addf %16, %19 : vector<8x512xf32>
    %21 = vector.extract_strided_slice %20 {offsets = [0, 0], sizes = [8, 384], strides = [1, 1]} : vector<8x512xf32> to vector<8x384xf32>
    %22 = arith.negf %21 : vector<8x384xf32>
    %23 = math.exp %22 : vector<8x384xf32>
    %cst_18 = arith.constant 1.000000e+00 : f32
    %24 = vector.broadcast %cst_18 : f32 to vector<8x384xf32>
    %25 = arith.addf %24, %23 : vector<8x384xf32>
    %26 = arith.divf %24, %25 : vector<8x384xf32>
    %27 = vector.extract_strided_slice %26 {offsets = [0, 0], sizes = [8, 128], strides = [1, 1]} : vector<8x384xf32> to vector<8x128xf32>
    %28 = vector.extract_strided_slice %26 {offsets = [0, 128], sizes = [8, 128], strides = [1, 1]} : vector<8x384xf32> to vector<8x128xf32>
    %29 = vector.extract_strided_slice %26 {offsets = [0, 256], sizes = [8, 128], strides = [1, 1]} : vector<8x384xf32> to vector<8x128xf32>
    %30 = vector.extract_strided_slice %20 {offsets = [0, 384], sizes = [8, 128], strides = [1, 1]} : vector<8x512xf32> to vector<8x128xf32>
    %31 = math.tanh %30 : vector<8x128xf32>
    %32 = arith.mulf %28, %12 : vector<8x128xf32>
    %33 = arith.mulf %27, %31 : vector<8x128xf32>
    %34 = arith.addf %32, %33 : vector<8x128xf32>
    %35 = math.tanh %34 : vector<8x128xf32>
    %36 = arith.mulf %29, %35 : vector<8x128xf32>
    %c1_i32 = arith.constant 1 : i32
    %c8_i32_19 = arith.constant 8 : i32
    %37 = arith.muli %c1_i32, %c8_i32_19 : i32
    %38 = tpu.assume_multiple %37, 8 : i32
    %39 = arith.index_cast %38 : i32 to index
    %c0_20 = arith.constant 0 : index
    %40 = vector.load %arg11[%39, %c0_20] : memref<64x512xf32, #tpu.memory_space<vmem>>, vector<8x512xf32>
    %41 = arith.truncf %36 : vector<8x128xf32> to vector<8x128xbf16>
    %c0_21 = arith.constant 0 : index
    %c0_22 = arith.constant 0 : index
    %42 = vector.load %arg4[%c0_21, %c0_22] : memref<128x512xbf16, #tpu.memory_space<vmem>>, vector<128x512xbf16>
    %cst_23 = arith.constant dense<0.000000e+00> : vector<8x512xf32>
    %43 = tpu.matmul %41, %42, %cst_23 {dimension_numbers = #tpu.dot_dimension_numbers<[1], [0], [0], [1], [0, 0, 1, 1], [], []>} : vector<8x128xbf16>, vector<128x512xbf16>, vector<8x512xf32> -> vector<8x512xf32>
    %44 = arith.addf %40, %43 : vector<8x512xf32>
    %45 = vector.extract_strided_slice %44 {offsets = [0, 0], sizes = [8, 384], strides = [1, 1]} : vector<8x512xf32> to vector<8x384xf32>
    %46 = arith.negf %45 : vector<8x384xf32>
    %47 = math.exp %46 : vector<8x384xf32>
    %cst_24 = arith.constant 1.000000e+00 : f32
    %48 = vector.broadcast %cst_24 : f32 to vector<8x384xf32>
    %49 = arith.addf %48, %47 : vector<8x384xf32>
    %50 = arith.divf %48, %49 : vector<8x384xf32>
    %51 = vector.extract_strided_slice %50 {offsets = [0, 0], sizes = [8, 128], strides = [1, 1]} : vector<8x384xf32> to vector<8x128xf32>
    %52 = vector.extract_strided_slice %50 {offsets = [0, 128], sizes = [8, 128], strides = [1, 1]} : vector<8x384xf32> to vector<8x128xf32>
    %53 = vector.extract_strided_slice %50 {offsets = [0, 256], sizes = [8, 128], strides = [1, 1]} : vector<8x384xf32> to vector<8x128xf32>
    %54 = vector.extract_strided_slice %44 {offsets = [0, 384], sizes = [8, 128], strides = [1, 1]} : vector<8x512xf32> to vector<8x128xf32>
    %55 = math.tanh %54 : vector<8x128xf32>
    %56 = arith.mulf %52, %34 : vector<8x128xf32>
    %57 = arith.mulf %51, %55 : vector<8x128xf32>
    %58 = arith.addf %56, %57 : vector<8x128xf32>
    %59 = math.tanh %58 : vector<8x128xf32>
    %60 = arith.mulf %53, %59 : vector<8x128xf32>
    %c2_i32 = arith.constant 2 : i32
    %c8_i32_25 = arith.constant 8 : i32
    %61 = arith.muli %c2_i32, %c8_i32_25 : i32
    %62 = tpu.assume_multiple %61, 8 : i32
    %63 = arith.index_cast %62 : i32 to index
    %c0_26 = arith.constant 0 : index
    %64 = vector.load %arg11[%63, %c0_26] : memref<64x512xf32, #tpu.memory_space<vmem>>, vector<8x512xf32>
    %65 = arith.truncf %60 : vector<8x128xf32> to vector<8x128xbf16>
    %c0_27 = arith.constant 0 : index
    %c0_28 = arith.constant 0 : index
    %66 = vector.load %arg4[%c0_27, %c0_28] : memref<128x512xbf16, #tpu.memory_space<vmem>>, vector<128x512xbf16>
    %cst_29 = arith.constant dense<0.000000e+00> : vector<8x512xf32>
    %67 = tpu.matmul %65, %66, %cst_29 {dimension_numbers = #tpu.dot_dimension_numbers<[1], [0], [0], [1], [0, 0, 1, 1], [], []>} : vector<8x128xbf16>, vector<128x512xbf16>, vector<8x512xf32> -> vector<8x512xf32>
    %68 = arith.addf %64, %67 : vector<8x512xf32>
    %69 = vector.extract_strided_slice %68 {offsets = [0, 0], sizes = [8, 384], strides = [1, 1]} : vector<8x512xf32> to vector<8x384xf32>
    %70 = arith.negf %69 : vector<8x384xf32>
    %71 = math.exp %70 : vector<8x384xf32>
    %cst_30 = arith.constant 1.000000e+00 : f32
    %72 = vector.broadcast %cst_30 : f32 to vector<8x384xf32>
    %73 = arith.addf %72, %71 : vector<8x384xf32>
    %74 = arith.divf %72, %73 : vector<8x384xf32>
    %75 = vector.extract_strided_slice %74 {offsets = [0, 0], sizes = [8, 128], strides = [1, 1]} : vector<8x384xf32> to vector<8x128xf32>
    %76 = vector.extract_strided_slice %74 {offsets = [0, 128], sizes = [8, 128], strides = [1, 1]} : vector<8x384xf32> to vector<8x128xf32>
    %77 = vector.extract_strided_slice %74 {offsets = [0, 256], sizes = [8, 128], strides = [1, 1]} : vector<8x384xf32> to vector<8x128xf32>
    %78 = vector.extract_strided_slice %68 {offsets = [0, 384], sizes = [8, 128], strides = [1, 1]} : vector<8x512xf32> to vector<8x128xf32>
    %79 = math.tanh %78 : vector<8x128xf32>
    %80 = arith.mulf %76, %58 : vector<8x128xf32>
    %81 = arith.mulf %75, %79 : vector<8x128xf32>
    %82 = arith.addf %80, %81 : vector<8x128xf32>
    %83 = math.tanh %82 : vector<8x128xf32>
    %84 = arith.mulf %77, %83 : vector<8x128xf32>
    %c3_i32 = arith.constant 3 : i32
    %c8_i32_31 = arith.constant 8 : i32
    %85 = arith.muli %c3_i32, %c8_i32_31 : i32
    %86 = tpu.assume_multiple %85, 8 : i32
    %87 = arith.index_cast %86 : i32 to index
    %c0_32 = arith.constant 0 : index
    %88 = vector.load %arg11[%87, %c0_32] : memref<64x512xf32, #tpu.memory_space<vmem>>, vector<8x512xf32>
    %89 = arith.truncf %84 : vector<8x128xf32> to vector<8x128xbf16>
    %c0_33 = arith.constant 0 : index
    %c0_34 = arith.constant 0 : index
    %90 = vector.load %arg4[%c0_33, %c0_34] : memref<128x512xbf16, #tpu.memory_space<vmem>>, vector<128x512xbf16>
    %cst_35 = arith.constant dense<0.000000e+00> : vector<8x512xf32>
    %91 = tpu.matmul %89, %90, %cst_35 {dimension_numbers = #tpu.dot_dimension_numbers<[1], [0], [0], [1], [0, 0, 1, 1], [], []>} : vector<8x128xbf16>, vector<128x512xbf16>, vector<8x512xf32> -> vector<8x512xf32>
    %92 = arith.addf %88, %91 : vector<8x512xf32>
    %93 = vector.extract_strided_slice %92 {offsets = [0, 0], sizes = [8, 384], strides = [1, 1]} : vector<8x512xf32> to vector<8x384xf32>
    %94 = arith.negf %93 : vector<8x384xf32>
    %95 = math.exp %94 : vector<8x384xf32>
    %cst_36 = arith.constant 1.000000e+00 : f32
    %96 = vector.broadcast %cst_36 : f32 to vector<8x384xf32>
    %97 = arith.addf %96, %95 : vector<8x384xf32>
    %98 = arith.divf %96, %97 : vector<8x384xf32>
    %99 = vector.extract_strided_slice %98 {offsets = [0, 0], sizes = [8, 128], strides = [1, 1]} : vector<8x384xf32> to vector<8x128xf32>
    %100 = vector.extract_strided_slice %98 {offsets = [0, 128], sizes = [8, 128], strides = [1, 1]} : vector<8x384xf32> to vector<8x128xf32>
    %101 = vector.extract_strided_slice %98 {offsets = [0, 256], sizes = [8, 128], strides = [1, 1]} : vector<8x384xf32> to vector<8x128xf32>
    %102 = vector.extract_strided_slice %92 {offsets = [0, 384], sizes = [8, 128], strides = [1, 1]} : vector<8x512xf32> to vector<8x128xf32>
    %103 = math.tanh %102 : vector<8x128xf32>
    %104 = arith.mulf %100, %82 : vector<8x128xf32>
    %105 = arith.mulf %99, %103 : vector<8x128xf32>
    %106 = arith.addf %104, %105 : vector<8x128xf32>
    %107 = math.tanh %106 : vector<8x128xf32>
    %108 = arith.mulf %101, %107 : vector<8x128xf32>
    %c4_i32 = arith.constant 4 : i32
    %c8_i32_37 = arith.constant 8 : i32
    %109 = arith.muli %c4_i32, %c8_i32_37 : i32
    %110 = tpu.assume_multiple %109, 8 : i32
    %111 = arith.index_cast %110 : i32 to index
    %c0_38 = arith.constant 0 : index
    %112 = vector.load %arg11[%111, %c0_38] : memref<64x512xf32, #tpu.memory_space<vmem>>, vector<8x512xf32>
    %113 = arith.truncf %108 : vector<8x128xf32> to vector<8x128xbf16>
    %c0_39 = arith.constant 0 : index
    %c0_40 = arith.constant 0 : index
    %114 = vector.load %arg4[%c0_39, %c0_40] : memref<128x512xbf16, #tpu.memory_space<vmem>>, vector<128x512xbf16>
    %cst_41 = arith.constant dense<0.000000e+00> : vector<8x512xf32>
    %115 = tpu.matmul %113, %114, %cst_41 {dimension_numbers = #tpu.dot_dimension_numbers<[1], [0], [0], [1], [0, 0, 1, 1], [], []>} : vector<8x128xbf16>, vector<128x512xbf16>, vector<8x512xf32> -> vector<8x512xf32>
    %116 = arith.addf %112, %115 : vector<8x512xf32>
    %117 = vector.extract_strided_slice %116 {offsets = [0, 0], sizes = [8, 384], strides = [1, 1]} : vector<8x512xf32> to vector<8x384xf32>
    %118 = arith.negf %117 : vector<8x384xf32>
    %119 = math.exp %118 : vector<8x384xf32>
    %cst_42 = arith.constant 1.000000e+00 : f32
    %120 = vector.broadcast %cst_42 : f32 to vector<8x384xf32>
    %121 = arith.addf %120, %119 : vector<8x384xf32>
    %122 = arith.divf %120, %121 : vector<8x384xf32>
    %123 = vector.extract_strided_slice %122 {offsets = [0, 0], sizes = [8, 128], strides = [1, 1]} : vector<8x384xf32> to vector<8x128xf32>
    %124 = vector.extract_strided_slice %122 {offsets = [0, 128], sizes = [8, 128], strides = [1, 1]} : vector<8x384xf32> to vector<8x128xf32>
    %125 = vector.extract_strided_slice %122 {offsets = [0, 256], sizes = [8, 128], strides = [1, 1]} : vector<8x384xf32> to vector<8x128xf32>
    %126 = vector.extract_strided_slice %116 {offsets = [0, 384], sizes = [8, 128], strides = [1, 1]} : vector<8x512xf32> to vector<8x128xf32>
    %127 = math.tanh %126 : vector<8x128xf32>
    %128 = arith.mulf %124, %106 : vector<8x128xf32>
    %129 = arith.mulf %123, %127 : vector<8x128xf32>
    %130 = arith.addf %128, %129 : vector<8x128xf32>
    %131 = math.tanh %130 : vector<8x128xf32>
    %132 = arith.mulf %125, %131 : vector<8x128xf32>
    %c5_i32 = arith.constant 5 : i32
    %c8_i32_43 = arith.constant 8 : i32
    %133 = arith.muli %c5_i32, %c8_i32_43 : i32
    %134 = tpu.assume_multiple %133, 8 : i32
    %135 = arith.index_cast %134 : i32 to index
    %c0_44 = arith.constant 0 : index
    %136 = vector.load %arg11[%135, %c0_44] : memref<64x512xf32, #tpu.memory_space<vmem>>, vector<8x512xf32>
    %137 = arith.truncf %132 : vector<8x128xf32> to vector<8x128xbf16>
    %c0_45 = arith.constant 0 : index
    %c0_46 = arith.constant 0 : index
    %138 = vector.load %arg4[%c0_45, %c0_46] : memref<128x512xbf16, #tpu.memory_space<vmem>>, vector<128x512xbf16>
    %cst_47 = arith.constant dense<0.000000e+00> : vector<8x512xf32>
    %139 = tpu.matmul %137, %138, %cst_47 {dimension_numbers = #tpu.dot_dimension_numbers<[1], [0], [0], [1], [0, 0, 1, 1], [], []>} : vector<8x128xbf16>, vector<128x512xbf16>, vector<8x512xf32> -> vector<8x512xf32>
    %140 = arith.addf %136, %139 : vector<8x512xf32>
    %141 = vector.extract_strided_slice %140 {offsets = [0, 0], sizes = [8, 384], strides = [1, 1]} : vector<8x512xf32> to vector<8x384xf32>
    %142 = arith.negf %141 : vector<8x384xf32>
    %143 = math.exp %142 : vector<8x384xf32>
    %cst_48 = arith.constant 1.000000e+00 : f32
    %144 = vector.broadcast %cst_48 : f32 to vector<8x384xf32>
    %145 = arith.addf %144, %143 : vector<8x384xf32>
    %146 = arith.divf %144, %145 : vector<8x384xf32>
    %147 = vector.extract_strided_slice %146 {offsets = [0, 0], sizes = [8, 128], strides = [1, 1]} : vector<8x384xf32> to vector<8x128xf32>
    %148 = vector.extract_strided_slice %146 {offsets = [0, 128], sizes = [8, 128], strides = [1, 1]} : vector<8x384xf32> to vector<8x128xf32>
    %149 = vector.extract_strided_slice %146 {offsets = [0, 256], sizes = [8, 128], strides = [1, 1]} : vector<8x384xf32> to vector<8x128xf32>
    %150 = vector.extract_strided_slice %140 {offsets = [0, 384], sizes = [8, 128], strides = [1, 1]} : vector<8x512xf32> to vector<8x128xf32>
    %151 = math.tanh %150 : vector<8x128xf32>
    %152 = arith.mulf %148, %130 : vector<8x128xf32>
    %153 = arith.mulf %147, %151 : vector<8x128xf32>
    %154 = arith.addf %152, %153 : vector<8x128xf32>
    %155 = math.tanh %154 : vector<8x128xf32>
    %156 = arith.mulf %149, %155 : vector<8x128xf32>
    %c6_i32 = arith.constant 6 : i32
    %c8_i32_49 = arith.constant 8 : i32
    %157 = arith.muli %c6_i32, %c8_i32_49 : i32
    %158 = tpu.assume_multiple %157, 8 : i32
    %159 = arith.index_cast %158 : i32 to index
    %c0_50 = arith.constant 0 : index
    %160 = vector.load %arg11[%159, %c0_50] : memref<64x512xf32, #tpu.memory_space<vmem>>, vector<8x512xf32>
    %161 = arith.truncf %156 : vector<8x128xf32> to vector<8x128xbf16>
    %c0_51 = arith.constant 0 : index
    %c0_52 = arith.constant 0 : index
    %162 = vector.load %arg4[%c0_51, %c0_52] : memref<128x512xbf16, #tpu.memory_space<vmem>>, vector<128x512xbf16>
    %cst_53 = arith.constant dense<0.000000e+00> : vector<8x512xf32>
    %163 = tpu.matmul %161, %162, %cst_53 {dimension_numbers = #tpu.dot_dimension_numbers<[1], [0], [0], [1], [0, 0, 1, 1], [], []>} : vector<8x128xbf16>, vector<128x512xbf16>, vector<8x512xf32> -> vector<8x512xf32>
    %164 = arith.addf %160, %163 : vector<8x512xf32>
    %165 = vector.extract_strided_slice %164 {offsets = [0, 0], sizes = [8, 384], strides = [1, 1]} : vector<8x512xf32> to vector<8x384xf32>
    %166 = arith.negf %165 : vector<8x384xf32>
    %167 = math.exp %166 : vector<8x384xf32>
    %cst_54 = arith.constant 1.000000e+00 : f32
    %168 = vector.broadcast %cst_54 : f32 to vector<8x384xf32>
    %169 = arith.addf %168, %167 : vector<8x384xf32>
    %170 = arith.divf %168, %169 : vector<8x384xf32>
    %171 = vector.extract_strided_slice %170 {offsets = [0, 0], sizes = [8, 128], strides = [1, 1]} : vector<8x384xf32> to vector<8x128xf32>
    %172 = vector.extract_strided_slice %170 {offsets = [0, 128], sizes = [8, 128], strides = [1, 1]} : vector<8x384xf32> to vector<8x128xf32>
    %173 = vector.extract_strided_slice %170 {offsets = [0, 256], sizes = [8, 128], strides = [1, 1]} : vector<8x384xf32> to vector<8x128xf32>
    %174 = vector.extract_strided_slice %164 {offsets = [0, 384], sizes = [8, 128], strides = [1, 1]} : vector<8x512xf32> to vector<8x128xf32>
    %175 = math.tanh %174 : vector<8x128xf32>
    %176 = arith.mulf %172, %154 : vector<8x128xf32>
    %177 = arith.mulf %171, %175 : vector<8x128xf32>
    %178 = arith.addf %176, %177 : vector<8x128xf32>
    %179 = math.tanh %178 : vector<8x128xf32>
    %180 = arith.mulf %173, %179 : vector<8x128xf32>
    %c7_i32 = arith.constant 7 : i32
    %c8_i32_55 = arith.constant 8 : i32
    %181 = arith.muli %c7_i32, %c8_i32_55 : i32
    %182 = tpu.assume_multiple %181, 8 : i32
    %183 = arith.index_cast %182 : i32 to index
    %c0_56 = arith.constant 0 : index
    %184 = vector.load %arg11[%183, %c0_56] : memref<64x512xf32, #tpu.memory_space<vmem>>, vector<8x512xf32>
    %185 = arith.truncf %180 : vector<8x128xf32> to vector<8x128xbf16>
    %c0_57 = arith.constant 0 : index
    %c0_58 = arith.constant 0 : index
    %186 = vector.load %arg4[%c0_57, %c0_58] : memref<128x512xbf16, #tpu.memory_space<vmem>>, vector<128x512xbf16>
    %cst_59 = arith.constant dense<0.000000e+00> : vector<8x512xf32>
    %187 = tpu.matmul %185, %186, %cst_59 {dimension_numbers = #tpu.dot_dimension_numbers<[1], [0], [0], [1], [0, 0, 1, 1], [], []>} : vector<8x128xbf16>, vector<128x512xbf16>, vector<8x512xf32> -> vector<8x512xf32>
    %188 = arith.addf %184, %187 : vector<8x512xf32>
    %189 = vector.extract_strided_slice %188 {offsets = [0, 0], sizes = [8, 384], strides = [1, 1]} : vector<8x512xf32> to vector<8x384xf32>
    %190 = arith.negf %189 : vector<8x384xf32>
    %191 = math.exp %190 : vector<8x384xf32>
    %cst_60 = arith.constant 1.000000e+00 : f32
    %192 = vector.broadcast %cst_60 : f32 to vector<8x384xf32>
    %193 = arith.addf %192, %191 : vector<8x384xf32>
    %194 = arith.divf %192, %193 : vector<8x384xf32>
    %195 = vector.extract_strided_slice %194 {offsets = [0, 0], sizes = [8, 128], strides = [1, 1]} : vector<8x384xf32> to vector<8x128xf32>
    %196 = vector.extract_strided_slice %194 {offsets = [0, 128], sizes = [8, 128], strides = [1, 1]} : vector<8x384xf32> to vector<8x128xf32>
    %197 = vector.extract_strided_slice %194 {offsets = [0, 256], sizes = [8, 128], strides = [1, 1]} : vector<8x384xf32> to vector<8x128xf32>
    %198 = vector.extract_strided_slice %188 {offsets = [0, 384], sizes = [8, 128], strides = [1, 1]} : vector<8x512xf32> to vector<8x128xf32>
    %199 = math.tanh %198 : vector<8x128xf32>
    %200 = arith.mulf %196, %178 : vector<8x128xf32>
    %201 = arith.mulf %195, %199 : vector<8x128xf32>
    %202 = arith.addf %200, %201 : vector<8x128xf32>
    %203 = math.tanh %202 : vector<8x128xf32>
    %204 = arith.mulf %197, %203 : vector<8x128xf32>
    %c8_i32_61 = arith.constant 8 : i32
    %c0_62 = arith.constant 0 : index
    %c0_63 = arith.constant 0 : index
    %205 = vector.load %arg9[%c0_62, %c0_63] : memref<8x128xf32, #tpu.memory_space<vmem>>, vector<8x128xf32>
    tpu.vector_store %arg9[%c0_62, %c0_63], %204 {strides = array<i32>} : memref<8x128xf32, #tpu.memory_space<vmem>>, vector<8x128xf32>,
    %c0_64 = arith.constant 0 : index
    %c0_65 = arith.constant 0 : index
    %206 = vector.load %arg10[%c0_64, %c0_65] : memref<8x128xf32, #tpu.memory_space<vmem>>, vector<8x128xf32>
    tpu.vector_store %arg10[%c0_64, %c0_65], %202 {strides = array<i32>} : memref<8x128xf32, #tpu.memory_space<vmem>>, vector<8x128xf32>,
    %c0_i32_66 = arith.constant 0 : i32
    %207 = arith.cmpi eq, %arg1, %c0_i32_66 : i32
    %208 = arith.extui %207 : i1 to i32
    %c0_i32_67 = arith.constant 0 : i32
    %209 = arith.cmpi ne, %208, %c0_i32_67 : i32
    scf.if %209 {
      %c0_68 = arith.constant 0 : index
      %c0_69 = arith.constant 0 : index
      %210 = vector.load %arg6[%c0_68, %c0_69] : memref<128x128xf32, #tpu.memory_space<vmem>>, vector<128x128xf32>
      %cst_70 = arith.constant dense<0.000000e+00> : vector<8x128xf32>
      %211 = tpu.matmul %204, %210, %cst_70 {dimension_numbers = #tpu.dot_dimension_numbers<[1], [0], [0], [1], [0, 0, 1, 1], [], []>} : vector<8x128xf32>, vector<128x128xf32>, vector<8x128xf32> -> vector<8x128xf32>
      %c0_71 = arith.constant 0 : index
      %c0_72 = arith.constant 0 : index
      %212 = vector.load %arg7[%c0_71, %c0_72] : memref<1x128xf32, #tpu.memory_space<vmem>>, vector<1x128xf32>
      %213 = vector.broadcast %212 : vector<1x128xf32> to vector<8x128xf32>
      %214 = arith.addf %211, %213 : vector<8x128xf32>
      %215 = arith.negf %214 : vector<8x128xf32>
      %216 = math.exp %215 : vector<8x128xf32>
      %cst_73 = arith.constant 1.000000e+00 : f32
      %217 = vector.broadcast %cst_73 : f32 to vector<8x128xf32>
      %218 = arith.addf %217, %216 : vector<8x128xf32>
      %219 = arith.divf %217, %218 : vector<8x128xf32>
      %c0_74 = arith.constant 0 : index
      %c0_75 = arith.constant 0 : index
      %220 = vector.load %arg8[%c0_74, %c0_75] : memref<8x128xf32, #tpu.memory_space<vmem>>, vector<8x128xf32>
      tpu.vector_store %arg8[%c0_74, %c0_75], %219 {strides = array<i32>} : memref<8x128xf32, #tpu.memory_space<vmem>>, vector<8x128xf32>,
    } else {
    }
    return
  }
  func.func @transform_0(%arg0: i32, %arg1: i32) -> (i32, i32, i32) {
    %c0_i32 = arith.constant 0 : i32
    %c0_i32_0 = arith.constant 0 : i32
    return %arg1, %arg0, %c0_i32 : i32, i32, i32
  }
  func.func @transform_1(%arg0: i32, %arg1: i32) -> (i32, i32) {
    %c0_i32 = arith.constant 0 : i32
    %c0_i32_0 = arith.constant 0 : i32
    %c0_i32_1 = arith.constant 0 : i32
    return %c0_i32, %c0_i32_0 : i32, i32
  }
  func.func @transform_2(%arg0: i32, %arg1: i32) -> (i32, i32) {
    %c0_i32 = arith.constant 0 : i32
    %c0_i32_0 = arith.constant 0 : i32
    %c0_i32_1 = arith.constant 0 : i32
    return %c0_i32, %c0_i32_0 : i32, i32
  }
  func.func @transform_3(%arg0: i32, %arg1: i32) -> (i32, i32) {
    %c0_i32 = arith.constant 0 : i32
    %c0_i32_0 = arith.constant 0 : i32
    %c0_i32_1 = arith.constant 0 : i32
    return %c0_i32, %c0_i32_0 : i32, i32
  }
  func.func @transform_4(%arg0: i32, %arg1: i32) -> (i32, i32) {
    %c0_i32 = arith.constant 0 : i32
    %c0_i32_0 = arith.constant 0 : i32
    %c0_i32_1 = arith.constant 0 : i32
    return %c0_i32, %c0_i32_0 : i32, i32
  }
  func.func @transform_5(%arg0: i32, %arg1: i32) -> (i32, i32) {
    %c0_i32 = arith.constant 0 : i32
    %c0_i32_0 = arith.constant 0 : i32
    %c0_i32_1 = arith.constant 0 : i32
    return %c0_i32, %c0_i32_0 : i32, i32
  }
  func.func @transform_6(%arg0: i32, %arg1: i32) -> (i32, i32) {
    %c0_i32 = arith.constant 0 : i32
    %c0_i32_0 = arith.constant 0 : i32
    return %arg0, %c0_i32 : i32, i32
  }
}

</mosaic_0001>

<llo_original>
// kernel: tpu_custom_call.1
$region0: #{tpu_custom_call.1}
  #allocation0 [shape = 'u32[]', space=smem, size = 0x4, offset = 0x4, fixed_abs, tag = 'smem constant byte address 0x4 - core index']
  #allocation1 [shape = 'u32[144,128]{1,0:T(1,128)}', space=vmem, size = 0x12000, scoped, tag = 'internal scratch']
  %s0 = inlined_call_operand.hbm [shape: f32[8,128], index: 0, kind: input, shape index: {}]
  %s1 = inlined_call_operand.hbm [shape: f32[8,128], index: 1, kind: output, shape index: {}]
  %s2 = sld [smem:[#allocation0]]
  $region18: #{tpu_custom_call.1} parent=0
    _
  %s4 = ssub.s32 1, %s2
  %s5 = scalar_select 0, %s4, %s2
  $region1: #{tpu_custom_call.1} parent=0
    #allocation2 [shape = 'u8[4096]{0}', space=vmem, size = 0x1000, scoped, tag = 'input window, operand 0, single buffered']
    #allocation3 [shape = 's32[1]{0}', space=sflag, size = 0x4, scoped, tag = 'scoped memory for tpu_custom_call.1']
    #allocation4 [shape = 's32[1]{0}', space=sflag, size = 0x4, scoped, tag = 'scoped memory for tpu_custom_call.1']
    #allocation5 [shape = 'u8[4096]{0}', space=vmem, size = 0x1000, scoped, tag = 'output window, operand 0, single buffered']
    %6 = vsyncpa [#allocation3], 0
    %7 = vsyncpa [#allocation4], 0
    // Predicated region
    $region2: #{tpu_custom_call.1} parent=1 // pred_check
      _
    $region3: #{tpu_custom_call.1} parent=1 // pred_check_branch
      %9 = sbr.rel (0) target = $region5
    $region4: #{tpu_custom_call.1} parent=1 // pred_region
      %s11 = ssub.s32 128, 128
      %12 = vsyncadd [#allocation3], %s11
      %s14 = sshll.u32 [#allocation2], 4
      %s15 = int_to_ptr.vmem [resolvable:$true] %s14
      %17 = dma.hbm_to_vmem [thread:$0]  %s0, 128, %s15, [#allocation3]
    $region5: #{tpu_custom_call.1} parent=1 // pred_fallthru
      _
    // Predicated region
    $region6: #{tpu_custom_call.1} parent=1 // pred_check
      _
    $region7: #{tpu_custom_call.1} parent=1 // pred_check_branch
      %19 = sbr.rel (0) target = $region9
    $region8: #{tpu_custom_call.1} parent=1 // pred_region
      %20 = dma.done [#allocation3], 128
    $region9: #{tpu_custom_call.1} parent=1 // pred_fallthru
      _
    %v21 = vld [vmem:[#allocation2] sm:$0xff]
    %v22 = vadd.f32 %v21, 1.0
    %23 = vst [vmem:[#allocation5] sm:$0xff] %v22
    // Predicated region
    $region10: #{tpu_custom_call.1} parent=1 // pred_check
      _
    $region11: #{tpu_custom_call.1} parent=1 // pred_check_branch
      %25 = sbr.rel (0) target = $region13
    $region12: #{tpu_custom_call.1} parent=1 // pred_region
      %s27 = ssub.s32 128, 128
      %28 = vsyncadd [#allocation4], %s27
      %s30 = sshll.u32 [#allocation5], 4
      %s31 = int_to_ptr.vmem [resolvable:$true] %s30
      %33 = dma.vmem_to_hbm [thread:$0]  %s31, 128, %s1, [#allocation4]
    $region13: #{tpu_custom_call.1} parent=1 // pred_fallthru
      _
    // Predicated region
    $region14: #{tpu_custom_call.1} parent=1 // pred_check
      _
    $region15: #{tpu_custom_call.1} parent=1 // pred_check_branch
      %35 = sbr.rel (0) target = $region17
    $region16: #{tpu_custom_call.1} parent=1 // pred_region
      %36 = dma.done [#allocation4], 128
    $region17: #{tpu_custom_call.1} parent=1 // pred_fallthru
      _
    %37 = vsyncpa [#allocation3], 1
    %38 = vsyncpa [#allocation4], 1

// kernel: lstm_model_forward.1
$region0: #{lstm_model_forward.1}
  #allocation0 [shape = 'u32[]', space=smem, size = 0x4, offset = 0x4, fixed_abs, tag = 'smem constant byte address 0x4 - core index']
  #allocation1 [shape = 'u32[144,128]{1,0:T(1,128)}', space=vmem, size = 0x12000, scoped, tag = 'internal scratch']
  #allocation2 [shape = 'f32[8,128]{1,0:T(8,128)}', space=vmem, size = 0x1000, scoped, tag = 'scratch operand']
  #allocation3 [shape = 'f32[8,128]{1,0:T(8,128)}', space=vmem, size = 0x1000, scoped, tag = 'scratch operand']
  #allocation4 [shape = 'f32[64,512]{1,0:T(8,128)}', space=vmem, size = 0x20000, scoped, tag = 'scratch operand']
  %s0 = inlined_call_operand.vmem [shape: bf16[8,8,128], index: 0, kind: input, shape index: {}]
  %s1 = inlined_call_operand.vmem [shape: bf16[128,512], index: 1, kind: input, shape index: {}]
  %s2 = inlined_call_operand.vmem [shape: bf16[128,512], index: 2, kind: input, shape index: {}]
  %s3 = inlined_call_operand.vmem [shape: f32[1,512], index: 3, kind: input, shape index: {}]
  %s4 = inlined_call_operand.vmem [shape: f32[128,128], index: 4, kind: input, shape index: {}]
  %s5 = inlined_call_operand.vmem [shape: f32[1,128], index: 5, kind: input, shape index: {}]
  %s6 = inlined_call_operand.vmem [shape: f32[8,128], index: 6, kind: output, shape index: {}]
  %s7 = sld [smem:[#allocation0]]
  $region42: #{lstm_model_forward.1} parent=0
    _
  %s9 = ssub.s32 1, %s7
  %s10 = scalar_select 0, %s9, %s7
  // Predicated region
  $region2: #{lstm_model_forward.1} parent=0 // pred_check
    _
  $region3: #{lstm_model_forward.1} parent=0 // pred_check_branch
    %12 = sbr.rel (0) target = $region5
  $region4: #{lstm_model_forward.1} parent=0 // pred_region
    _
  $region5: #{lstm_model_forward.1} parent=0 // pred_fallthru
    _
  // Predicated region
  $region6: #{lstm_model_forward.1} parent=0 // pred_check
    _
  $region7: #{lstm_model_forward.1} parent=0 // pred_check_branch
    %14 = sbr.rel (0) target = $region9
  $region8: #{lstm_model_forward.1} parent=0 // pred_region
    _
  $region9: #{lstm_model_forward.1} parent=0 // pred_fallthru
    _
  // Predicated region
  $region10: #{lstm_model_forward.1} parent=0 // pred_check
    _
  $region11: #{lstm_model_forward.1} parent=0 // pred_check_branch
    %16 = sbr.rel (0) target = $region13
  $region12: #{lstm_model_forward.1} parent=0 // pred_region
    _
  $region13: #{lstm_model_forward.1} parent=0 // pred_fallthru
    _
  // Predicated region
  $region14: #{lstm_model_forward.1} parent=0 // pred_check
    _
  $region15: #{lstm_model_forward.1} parent=0 // pred_check_branch
    %18 = sbr.rel (0) target = $region17
  $region16: #{lstm_model_forward.1} parent=0 // pred_region
    _
  $region17: #{lstm_model_forward.1} parent=0 // pred_fallthru
    _
  // Predicated region
  $region18: #{lstm_model_forward.1} parent=0 // pred_check
    _
  $region19: #{lstm_model_forward.1} parent=0 // pred_check_branch
    %20 = sbr.rel (0) target = $region21
  $region20: #{lstm_model_forward.1} parent=0 // pred_region
    _
  $region21: #{lstm_model_forward.1} parent=0 // pred_fallthru
    _
  // Predicated region
  $region22: #{lstm_model_forward.1} parent=0 // pred_check
    _
  $region23: #{lstm_model_forward.1} parent=0 // pred_check_branch
    %22 = sbr.rel (0) target = $region25
  $region24: #{lstm_model_forward.1} parent=0 // pred_region
    _
  $region25: #{lstm_model_forward.1} parent=0 // pred_fallthru
    _
  %p24 = scmp.eq.s32.totalorder 0, 0
  // Predicated region
  $region26: #{lstm_model_forward.1} parent=0 // pred_check
    %p25 = pneg %p24
  $region27: #{lstm_model_forward.1} parent=0 // pred_check_branch
    %27 = sbr.rel (%p25) target = $region29
  $region28: #{lstm_model_forward.1} parent=0 // pred_region
    %28 = vst [vmem:[#allocation2] sm:$0xff] 0.0
    %29 = vst [vmem:[#allocation3] sm:$0xff] 0.0
  $region29: #{lstm_model_forward.1} parent=0 // pred_fallthru
    _
  %v30 = vld [vmem:[%s0] sm:$0xf]
  %v31 = vld [vmem:[%s0 + $0x4] sm:$0xf]
  %v32 = vld [vmem:[%s0 + $0x8] sm:$0xf]
  %v33 = vld [vmem:[%s0 + $0xc] sm:$0xf]
  %v34 = vld [vmem:[%s0 + $0x10] sm:$0xf]
  %v35 = vld [vmem:[%s0 + $0x14] sm:$0xf]
  %v36 = vld [vmem:[%s0 + $0x18] sm:$0xf]
  %v37 = vld [vmem:[%s0 + $0x1c] sm:$0xf]
  %v38 = vld [vmem:[%s1] sm:$0xff]
  %v39 = vld [vmem:[%s1 + $0x8] sm:$0xff]
  %v40 = vld [vmem:[%s1 + $0x10] sm:$0xff]
  %v41 = vld [vmem:[%s1 + $0x18] sm:$0xff]
  %v42 = vld [vmem:[%s1 + $0x20] sm:$0xff]
  %v43 = vld [vmem:[%s1 + $0x28] sm:$0xff]
  %v44 = vld [vmem:[%s1 + $0x30] sm:$0xff]
  %v45 = vld [vmem:[%s1 + $0x38] sm:$0xff]
  %v46 = vld [vmem:[%s1 + $0x40] sm:$0xff]
  %v47 = vld [vmem:[%s1 + $0x48] sm:$0xff]
  %v48 = vld [vmem:[%s1 + $0x50] sm:$0xff]
  %v49 = vld [vmem:[%s1 + $0x58] sm:$0xff]
  %v50 = vld [vmem:[%s1 + $0x60] sm:$0xff]
  %v51 = vld [vmem:[%s1 + $0x68] sm:$0xff]
  %v52 = vld [vmem:[%s1 + $0x70] sm:$0xff]
  %v53 = vld [vmem:[%s1 + $0x78] sm:$0xff]
  %v54 = vld [vmem:[%s1 + $0x80] sm:$0xff]
  %v55 = vld [vmem:[%s1 + $0x88] sm:$0xff]
  %v56 = vld [vmem:[%s1 + $0x90] sm:$0xff]
  %v57 = vld [vmem:[%s1 + $0x98] sm:$0xff]
  %v58 = vld [vmem:[%s1 + $0xa0] sm:$0xff]
  %v59 = vld [vmem:[%s1 + $0xa8] sm:$0xff]
  %v60 = vld [vmem:[%s1 + $0xb0] sm:$0xff]
  %v61 = vld [vmem:[%s1 + $0xb8] sm:$0xff]
  %v62 = vld [vmem:[%s1 + $0xc0] sm:$0xff]
  %v63 = vld [vmem:[%s1 + $0xc8] sm:$0xff]
  %v64 = vld [vmem:[%s1 + $0xd0] sm:$0xff]
  %v65 = vld [vmem:[%s1 + $0xd8] sm:$0xff]
  %v66 = vld [vmem:[%s1 + $0xe0] sm:$0xff]
  %v67 = vld [vmem:[%s1 + $0xe8] sm:$0xff]
  %v68 = vld [vmem:[%s1 + $0xf0] sm:$0xff]
  %v69 = vld [vmem:[%s1 + $0xf8] sm:$0xff]
  %v70 = vld [vmem:[%s3] sm:$0xf]
  %v72 = vlaneseq
  %v73 = vshrl.u32 %v72, 7
  %v74 = vsub.s32 0, %v73
  %v75 = vrot.slane %v70, %v74
  %v76 = vlaneseq
  %v77 = vshrl.u32 %v76, 7
  %v78 = vsub.s32 1, %v77
  %v79 = vrot.slane %v70, %v78
  %v80 = vlaneseq
  %v81 = vshrl.u32 %v80, 7
  %v82 = vsub.s32 2, %v81
  %v83 = vrot.slane %v70, %v82
  %v84 = vlaneseq
  %v85 = vshrl.u32 %v84, 7
  %v86 = vsub.s32 3, %v85
  %v87 = vrot.slane %v70, %v86
  %v100 = vunpack.c.l.b16 %v30
  %v101 = vunpack.c.l.b16 %v31
  %v102 = vunpack.c.l.b16 %v32
  %v103 = vunpack.c.l.b16 %v33
  %v104 = vunpack.c.l.b16 %v34
  %v105 = vunpack.c.l.b16 %v35
  %v106 = vunpack.c.l.b16 %v36
  %v107 = vunpack.c.l.b16 %v37
  %v108 = vpack.c.b16 %v101, %v100
  %v109 = vpack.c.b16 %v103, %v102
  %v110 = vpack.c.b16 %v105, %v104
  %v111 = vpack.c.b16 %v107, %v106
  %v148 = vunpack.c.l.b16 %v38
  %v149 = vunpack.c.h.b16 %v38
  %v150 = vunpack.c.l.b16 %v39
  %v151 = vunpack.c.h.b16 %v39
  %v152 = vunpack.c.l.b16 %v40
  %v153 = vunpack.c.h.b16 %v40
  %v154 = vunpack.c.l.b16 %v41
  %v155 = vunpack.c.h.b16 %v41
  %v156 = vunpack.c.l.b16 %v42
  %v157 = vunpack.c.h.b16 %v42
  %v158 = vunpack.c.l.b16 %v43
  %v159 = vunpack.c.h.b16 %v43
  %v160 = vunpack.c.l.b16 %v44
  %v161 = vunpack.c.h.b16 %v44
  %v162 = vunpack.c.l.b16 %v45
  %v163 = vunpack.c.h.b16 %v45
  %v164 = vunpack.c.l.b16 %v46
  %v165 = vunpack.c.h.b16 %v46
  %v166 = vunpack.c.l.b16 %v47
  %v167 = vunpack.c.h.b16 %v47
  %v168 = vunpack.c.l.b16 %v48
  %v169 = vunpack.c.h.b16 %v48
  %v170 = vunpack.c.l.b16 %v49
  %v171 = vunpack.c.h.b16 %v49
  %v172 = vunpack.c.l.b16 %v50
  %v173 = vunpack.c.h.b16 %v50
  %v174 = vunpack.c.l.b16 %v51
  %v175 = vunpack.c.h.b16 %v51
  %v176 = vunpack.c.l.b16 %v52
  %v177 = vunpack.c.h.b16 %v52
  %v178 = vunpack.c.l.b16 %v53
  %v179 = vunpack.c.h.b16 %v53
  %v180 = vunpack.c.l.b16 %v54
  %v181 = vunpack.c.h.b16 %v54
  %v182 = vunpack.c.l.b16 %v55
  %v183 = vunpack.c.h.b16 %v55
  %v184 = vunpack.c.l.b16 %v56
  %v185 = vunpack.c.h.b16 %v56
  %v186 = vunpack.c.l.b16 %v57
  %v187 = vunpack.c.h.b16 %v57
  %v188 = vunpack.c.l.b16 %v58
  %v189 = vunpack.c.h.b16 %v58
  %v190 = vunpack.c.l.b16 %v59
  %v191 = vunpack.c.h.b16 %v59
  %v192 = vunpack.c.l.b16 %v60
  %v193 = vunpack.c.h.b16 %v60
  %v194 = vunpack.c.l.b16 %v61
  %v195 = vunpack.c.h.b16 %v61
  %v196 = vunpack.c.l.b16 %v62
  %v197 = vunpack.c.h.b16 %v62
  %v198 = vunpack.c.l.b16 %v63
  %v199 = vunpack.c.h.b16 %v63
  %v200 = vunpack.c.l.b16 %v64
  %v201 = vunpack.c.h.b16 %v64
  %v202 = vunpack.c.l.b16 %v65
  %v203 = vunpack.c.h.b16 %v65
  %v204 = vunpack.c.l.b16 %v66
  %v205 = vunpack.c.h.b16 %v66
  %v206 = vunpack.c.l.b16 %v67
  %v207 = vunpack.c.h.b16 %v67
  %v208 = vunpack.c.l.b16 %v68
  %v209 = vunpack.c.h.b16 %v68
  %v210 = vunpack.c.l.b16 %v69
  %v211 = vunpack.c.h.b16 %v69
  %v212 = vpack.c.b16 %v152, %v148
  %v213 = vpack.c.b16 %v153, %v149
  %v214 = vpack.c.b16 %v154, %v150
  %v215 = vpack.c.b16 %v155, %v151
  %v216 = vpack.c.b16 %v160, %v156
  %v217 = vpack.c.b16 %v161, %v157
  %v218 = vpack.c.b16 %v162, %v158
  %v219 = vpack.c.b16 %v163, %v159
  %v220 = vpack.c.b16 %v168, %v164
  %v221 = vpack.c.b16 %v169, %v165
  %v222 = vpack.c.b16 %v170, %v166
  %v223 = vpack.c.b16 %v171, %v167
  %v224 = vpack.c.b16 %v176, %v172
  %v225 = vpack.c.b16 %v177, %v173
  %v226 = vpack.c.b16 %v178, %v174
  %v227 = vpack.c.b16 %v179, %v175
  %v228 = vpack.c.b16 %v184, %v180
  %v229 = vpack.c.b16 %v185, %v181
  %v230 = vpack.c.b16 %v186, %v182
  %v231 = vpack.c.b16 %v187, %v183
  %v232 = vpack.c.b16 %v192, %v188
  %v233 = vpack.c.b16 %v193, %v189
  %v234 = vpack.c.b16 %v194, %v190
  %v235 = vpack.c.b16 %v195, %v191
  %v236 = vpack.c.b16 %v200, %v196
  %v237 = vpack.c.b16 %v201, %v197
  %v238 = vpack.c.b16 %v202, %v198
  %v239 = vpack.c.b16 %v203, %v199
  %v240 = vpack.c.b16 %v208, %v204
  %v241 = vpack.c.b16 %v209, %v205
  %v242 = vpack.c.b16 %v210, %v206
  %v243 = vpack.c.b16 %v211, %v207
  %276 = vmatprep.subr.bf16.mxu0 %v213
  %277 = vmatpush1.bf16.msra.mxu0 %v212
  %278 = vmatprep.subr.bf16.mxu0 %v217
  %279 = vmatpush1.bf16.msra.mxu0 %v216
  %280 = vmatprep.subr.bf16.mxu0 %v221
  %281 = vmatpush1.bf16.msra.mxu0 %v220
  %282 = vmatprep.subr.bf16.mxu0 %v225
  %283 = vmatpush1.bf16.msra.mxu0 %v224
  %284 = vmatprep.subr.bf16.mxu0 %v229
  %285 = vmatpush1.bf16.msra.mxu0 %v228
  %286 = vmatprep.subr.bf16.mxu0 %v233
  %287 = vmatpush1.bf16.msra.mxu0 %v232
  %288 = vmatprep.subr.bf16.mxu0 %v237
  %289 = vmatpush1.bf16.msra.mxu0 %v236
  %290 = vmatprep.subr.bf16.mxu0 %v241
  %291 = vmatpush1.bf16.msra.mxu0 %v240
  %292 = vmatprep.subr.bf16.mxu0 0
  %293 = vmatpush1.bf16.msra.mxu0 0
  %294 = vmatprep.subr.bf16.mxu0 0
  %295 = vmatpush1.bf16.msra.mxu0 0
  %296 = vmatprep.subr.bf16.mxu0 0
  %297 = vmatpush1.bf16.msra.mxu0 0
  %298 = vmatprep.subr.bf16.mxu0 0
  %299 = vmatpush1.bf16.msra.mxu0 0
  %300 = vmatprep.subr.bf16.mxu0 0
  %301 = vmatpush1.bf16.msra.mxu0 0
  %302 = vmatprep.subr.bf16.mxu0 0
  %303 = vmatpush1.bf16.msra.mxu0 0
  %304 = vmatprep.subr.bf16.mxu0 0
  %305 = vmatpush1.bf16.msra.mxu0 0
  %306 = vmatprep.subr.bf16.mxu0 0
  %307 = vmatpush1.bf16.msra.mxu0 0
  %308 = vmatprep.mubr.bf16.mxu0 0
  %309 = vmatmul.mubr.bf16.gmra.mrb[0].mxu0 %v108
  %v310 = vpop.f32.mrb[0].mxu0
  %v311 = vadd.f32 %v75, %v310
  %v312 = vpop.f32.mrb[0].mxu0
  %v313 = vadd.f32 %v79, %v312
  %v314 = vpop.f32.mrb[0].mxu0
  %v315 = vadd.f32 %v75, %v314
  %v316 = vpop.f32.mrb[0].mxu0
  %v317 = vadd.f32 %v79, %v316
  %318 = vmatprep.mubr.bf16.mxu0 0
  %319 = vmatmul.mubr.bf16.gmra.mrb[0].mxu0 %v109
  %v320 = vpop.f32.mrb[0].mxu0
  %v321 = vadd.f32 %v75, %v320
  %v322 = vpop.f32.mrb[0].mxu0
  %v323 = vadd.f32 %v79, %v322
  %v324 = vpop.f32.mrb[0].mxu0
  %v325 = vadd.f32 %v75, %v324
  %v326 = vpop.f32.mrb[0].mxu0
  %v327 = vadd.f32 %v79, %v326
  %328 = vmatprep.mubr.bf16.mxu0 0
  %329 = vmatmul.mubr.bf16.gmra.mrb[0].mxu0 %v110
  %v330 = vpop.f32.mrb[0].mxu0
  %v331 = vadd.f32 %v75, %v330
  %v332 = vpop.f32.mrb[0].mxu0
  %v333 = vadd.f32 %v79, %v332
  %v334 = vpop.f32.mrb[0].mxu0
  %v335 = vadd.f32 %v75, %v334
  %v336 = vpop.f32.mrb[0].mxu0
  %v337 = vadd.f32 %v79, %v336
  %338 = vmatprep.mubr.bf16.mxu0 0
  %339 = vmatmul.mubr.bf16.gmra.mrb[0].mxu0 %v111
  %v340 = vpop.f32.mrb[0].mxu0
  %v341 = vadd.f32 %v75, %v340
  %v342 = vpop.f32.mrb[0].mxu0
  %v343 = vadd.f32 %v79, %v342
  %v344 = vpop.f32.mrb[0].mxu0
  %v345 = vadd.f32 %v75, %v344
  %v346 = vpop.f32.mrb[0].mxu0
  %v347 = vadd.f32 %v79, %v346
  %348 = vdwg.mxu0
  %349 = vmatprep.subr.bf16.mxu0 %v215
  %350 = vmatpush1.bf16.msra.mxu0 %v214
  %351 = vmatprep.subr.bf16.mxu0 %v219
  %352 = vmatpush1.bf16.msra.mxu0 %v218
  %353 = vmatprep.subr.bf16.mxu0 %v223
  %354 = vmatpush1.bf16.msra.mxu0 %v222
  %355 = vmatprep.subr.bf16.mxu0 %v227
  %356 = vmatpush1.bf16.msra.mxu0 %v226
  %357 = vmatprep.subr.bf16.mxu0 %v231
  %358 = vmatpush1.bf16.msra.mxu0 %v230
  %359 = vmatprep.subr.bf16.mxu0 %v235
  %360 = vmatpush1.bf16.msra.mxu0 %v234
  %361 = vmatprep.subr.bf16.mxu0 %v239
  %362 = vmatpush1.bf16.msra.mxu0 %v238
  %363 = vmatprep.subr.bf16.mxu0 %v243
  %364 = vmatpush1.bf16.msra.mxu0 %v242
  %365 = vmatprep.subr.bf16.mxu0 0
  %366 = vmatpush1.bf16.msra.mxu0 0
  %367 = vmatprep.subr.bf16.mxu0 0
  %368 = vmatpush1.bf16.msra.mxu0 0
  %369 = vmatprep.subr.bf16.mxu0 0
  %370 = vmatpush1.bf16.msra.mxu0 0
  %371 = vmatprep.subr.bf16.mxu0 0
  %372 = vmatpush1.bf16.msra.mxu0 0
  %373 = vmatprep.subr.bf16.mxu0 0
  %374 = vmatpush1.bf16.msra.mxu0 0
  %375 = vmatprep.subr.bf16.mxu0 0
  %376 = vmatpush1.bf16.msra.mxu0 0
  %377 = vmatprep.subr.bf16.mxu0 0
  %378 = vmatpush1.bf16.msra.mxu0 0
  %379 = vmatprep.subr.bf16.mxu0 0
  %380 = vmatpush1.bf16.msra.mxu0 0
  %381 = vmatprep.mubr.bf16.mxu0 0
  %382 = vmatmul.mubr.bf16.gmra.mrb[0].mxu0 %v108
  %v383 = vpop.f32.mrb[0].mxu0
  %v384 = vadd.f32 %v83, %v383
  %v385 = vpop.f32.mrb[0].mxu0
  %v386 = vadd.f32 %v87, %v385
  %v387 = vpop.f32.mrb[0].mxu0
  %v388 = vadd.f32 %v83, %v387
  %v389 = vpop.f32.mrb[0].mxu0
  %v390 = vadd.f32 %v87, %v389
  %391 = vmatprep.mubr.bf16.mxu0 0
  %392 = vmatmul.mubr.bf16.gmra.mrb[0].mxu0 %v109
  %v393 = vpop.f32.mrb[0].mxu0
  %v394 = vadd.f32 %v83, %v393
  %v395 = vpop.f32.mrb[0].mxu0
  %v396 = vadd.f32 %v87, %v395
  %v397 = vpop.f32.mrb[0].mxu0
  %v398 = vadd.f32 %v83, %v397
  %v399 = vpop.f32.mrb[0].mxu0
  %v400 = vadd.f32 %v87, %v399
  %401 = vmatprep.mubr.bf16.mxu0 0
  %402 = vmatmul.mubr.bf16.gmra.mrb[0].mxu0 %v110
  %v403 = vpop.f32.mrb[0].mxu0
  %v404 = vadd.f32 %v83, %v403
  %v405 = vpop.f32.mrb[0].mxu0
  %v406 = vadd.f32 %v87, %v405
  %v407 = vpop.f32.mrb[0].mxu0
  %v408 = vadd.f32 %v83, %v407
  %v409 = vpop.f32.mrb[0].mxu0
  %v410 = vadd.f32 %v87, %v409
  %411 = vmatprep.mubr.bf16.mxu0 0
  %412 = vmatmul.mubr.bf16.gmra.mrb[0].mxu0 %v111
  %v413 = vpop.f32.mrb[0].mxu0
  %v414 = vadd.f32 %v83, %v413
  %v415 = vpop.f32.mrb[0].mxu0
  %v416 = vadd.f32 %v87, %v415
  %v417 = vpop.f32.mrb[0].mxu0
  %v418 = vadd.f32 %v83, %v417
  %v419 = vpop.f32.mrb[0].mxu0
  %v420 = vadd.f32 %v87, %v419
  %421 = vdwg.mxu0
  %422 = vst [vmem:[#allocation4] sm:$0xff] %v311
  %423 = vst [vmem:[#allocation4 + $0x8] sm:$0xff] %v313
  %424 = vst [vmem:[#allocation4 + $0x10] sm:$0xff] %v384
  %425 = vst [vmem:[#allocation4 + $0x18] sm:$0xff] %v386
  %426 = vst [vmem:[#allocation4 + $0x20] sm:$0xff] %v315
  %427 = vst [vmem:[#allocation4 + $0x28] sm:$0xff] %v317
  %428 = vst [vmem:[#allocation4 + $0x30] sm:$0xff] %v388
  %429 = vst [vmem:[#allocation4 + $0x38] sm:$0xff] %v390
  %430 = vst [vmem:[#allocation4 + $0x40] sm:$0xff] %v321
  %431 = vst [vmem:[#allocation4 + $0x48] sm:$0xff] %v323
  %432 = vst [vmem:[#allocation4 + $0x50] sm:$0xff] %v394
  %433 = vst [vmem:[#allocation4 + $0x58] sm:$0xff] %v396
  %434 = vst [vmem:[#allocation4 + $0x60] sm:$0xff] %v325
  %435 = vst [vmem:[#allocation4 + $0x68] sm:$0xff] %v327
  %436 = vst [vmem:[#allocation4 + $0x70] sm:$0xff] %v398
  %437 = vst [vmem:[#allocation4 + $0x78] sm:$0xff] %v400
  %438 = vst [vmem:[#allocation4 + $0x80] sm:$0xff] %v331
  %439 = vst [vmem:[#allocation4 + $0x88] sm:$0xff] %v333
  %440 = vst [vmem:[#allocation4 + $0x90] sm:$0xff] %v404
  %441 = vst [vmem:[#allocation4 + $0x98] sm:$0xff] %v406
  %442 = vst [vmem:[#allocation4 + $0xa0] sm:$0xff] %v335
  %443 = vst [vmem:[#allocation4 + $0xa8] sm:$0xff] %v337
  %444 = vst [vmem:[#allocation4 + $0xb0] sm:$0xff] %v408
  %445 = vst [vmem:[#allocation4 + $0xb8] sm:$0xff] %v410
  %446 = vst [vmem:[#allocation4 + $0xc0] sm:$0xff] %v341
  %447 = vst [vmem:[#allocation4 + $0xc8] sm:$0xff] %v343
  %448 = vst [vmem:[#allocation4 + $0xd0] sm:$0xff] %v414
  %449 = vst [vmem:[#allocation4 + $0xd8] sm:$0xff] %v416
  %450 = vst [vmem:[#allocation4 + $0xe0] sm:$0xff] %v345
  %451 = vst [vmem:[#allocation4 + $0xe8] sm:$0xff] %v347
  %452 = vst [vmem:[#allocation4 + $0xf0] sm:$0xff] %v418
  %453 = vst [vmem:[#allocation4 + $0xf8] sm:$0xff] %v420
  %v454 = vld [vmem:[#allocation2] sm:$0xff]
  %v455 = vld [vmem:[#allocation3] sm:$0xff]
  %s456 = smul.u32 0, 4
  %s457 = smul.addr %s456, 8
  %s458 = scalar_lea.vmem [#allocation4], %s457
  %v459 = vld [vmem:[%s458] sm:$0xff]
  %v460 = vld [vmem:[%s458 + $0x8] sm:$0xff]
  %v461 = vld [vmem:[%s458 + $0x10] sm:$0xff]
  %v462 = vld [vmem:[%s458 + $0x18] sm:$0xff]
  %v463 = vpack.c.bf16 %v454, %v454
  %v464 = vld [vmem:[%s2] sm:$0xff]
  %v465 = vld [vmem:[%s2 + $0x8] sm:$0xff]
  %v466 = vld [vmem:[%s2 + $0x10] sm:$0xff]
  %v467 = vld [vmem:[%s2 + $0x18] sm:$0xff]
  %v468 = vld [vmem:[%s2 + $0x20] sm:$0xff]
  %v469 = vld [vmem:[%s2 + $0x28] sm:$0xff]
  %v470 = vld [vmem:[%s2 + $0x30] sm:$0xff]
  %v471 = vld [vmem:[%s2 + $0x38] sm:$0xff]
  %v472 = vld [vmem:[%s2 + $0x40] sm:$0xff]
  %v473 = vld [vmem:[%s2 + $0x48] sm:$0xff]
  %v474 = vld [vmem:[%s2 + $0x50] sm:$0xff]
  %v475 = vld [vmem:[%s2 + $0x58] sm:$0xff]
  %v476 = vld [vmem:[%s2 + $0x60] sm:$0xff]
  %v477 = vld [vmem:[%s2 + $0x68] sm:$0xff]
  %v478 = vld [vmem:[%s2 + $0x70] sm:$0xff]
  %v479 = vld [vmem:[%s2 + $0x78] sm:$0xff]
  %v480 = vld [vmem:[%s2 + $0x80] sm:$0xff]
  %v481 = vld [vmem:[%s2 + $0x88] sm:$0xff]
  %v482 = vld [vmem:[%s2 + $0x90] sm:$0xff]
  %v483 = vld [vmem:[%s2 + $0x98] sm:$0xff]
  %v484 = vld [vmem:[%s2 + $0xa0] sm:$0xff]
  %v485 = vld [vmem:[%s2 + $0xa8] sm:$0xff]
  %v486 = vld [vmem:[%s2 + $0xb0] sm:$0xff]
  %v487 = vld [vmem:[%s2 + $0xb8] sm:$0xff]
  %v488 = vld [vmem:[%s2 + $0xc0] sm:$0xff]
  %v489 = vld [vmem:[%s2 + $0xc8] sm:$0xff]
  %v490 = vld [vmem:[%s2 + $0xd0] sm:$0xff]
  %v491 = vld [vmem:[%s2 + $0xd8] sm:$0xff]
  %v492 = vld [vmem:[%s2 + $0xe0] sm:$0xff]
  %v493 = vld [vmem:[%s2 + $0xe8] sm:$0xff]
  %v494 = vld [vmem:[%s2 + $0xf0] sm:$0xff]
  %v495 = vld [vmem:[%s2 + $0xf8] sm:$0xff]
  %v528 = vunpack.c.l.b16 %v464
  %v529 = vunpack.c.h.b16 %v464
  %v530 = vunpack.c.l.b16 %v465
  %v531 = vunpack.c.h.b16 %v465
  %v532 = vunpack.c.l.b16 %v466
  %v533 = vunpack.c.h.b16 %v466
  %v534 = vunpack.c.l.b16 %v467
  %v535 = vunpack.c.h.b16 %v467
  %v536 = vunpack.c.l.b16 %v468
  %v537 = vunpack.c.h.b16 %v468
  %v538 = vunpack.c.l.b16 %v469
  %v539 = vunpack.c.h.b16 %v469
  %v540 = vunpack.c.l.b16 %v470
  %v541 = vunpack.c.h.b16 %v470
  %v542 = vunpack.c.l.b16 %v471
  %v543 = vunpack.c.h.b16 %v471
  %v544 = vunpack.c.l.b16 %v472
  %v545 = vunpack.c.h.b16 %v472
  %v546 = vunpack.c.l.b16 %v473
  %v547 = vunpack.c.h.b16 %v473
  %v548 = vunpack.c.l.b16 %v474
  %v549 = vunpack.c.h.b16 %v474
  %v550 = vunpack.c.l.b16 %v475
  %v551 = vunpack.c.h.b16 %v475
  %v552 = vunpack.c.l.b16 %v476
  %v553 = vunpack.c.h.b16 %v476
  %v554 = vunpack.c.l.b16 %v477
  %v555 = vunpack.c.h.b16 %v477
  %v556 = vunpack.c.l.b16 %v478
  %v557 = vunpack.c.h.b16 %v478
  %v558 = vunpack.c.l.b16 %v479
  %v559 = vunpack.c.h.b16 %v479
  %v560 = vunpack.c.l.b16 %v480
  %v561 = vunpack.c.h.b16 %v480
  %v562 = vunpack.c.l.b16 %v481
  %v563 = vunpack.c.h.b16 %v481
  %v564 = vunpack.c.l.b16 %v482
  %v565 = vunpack.c.h.b16 %v482
  %v566 = vunpack.c.l.b16 %v483
  %v567 = vunpack.c.h.b16 %v483
  %v568 = vunpack.c.l.b16 %v484
  %v569 = vunpack.c.h.b16 %v484
  %v570 = vunpack.c.l.b16 %v485
  %v571 = vunpack.c.h.b16 %v485
  %v572 = vunpack.c.l.b16 %v486
  %v573 = vunpack.c.h.b16 %v486
  %v574 = vunpack.c.l.b16 %v487
  %v575 = vunpack.c.h.b16 %v487
  %v576 = vunpack.c.l.b16 %v488
  %v577 = vunpack.c.h.b16 %v488
  %v578 = vunpack.c.l.b16 %v489
  %v579 = vunpack.c.h.b16 %v489
  %v580 = vunpack.c.l.b16 %v490
  %v581 = vunpack.c.h.b16 %v490
  %v582 = vunpack.c.l.b16 %v491
  %v583 = vunpack.c.h.b16 %v491
  %v584 = vunpack.c.l.b16 %v492
  %v585 = vunpack.c.h.b16 %v492
  %v586 = vunpack.c.l.b16 %v493
  %v587 = vunpack.c.h.b16 %v493
  %v588 = vunpack.c.l.b16 %v494
  %v589 = vunpack.c.h.b16 %v494
  %v590 = vunpack.c.l.b16 %v495
  %v591 = vunpack.c.h.b16 %v495
  %v592 = vpack.c.b16 %v532, %v528
  %v593 = vpack.c.b16 %v533, %v529
  %v594 = vpack.c.b16 %v534, %v530
  %v595 = vpack.c.b16 %v535, %v531
  %v596 = vpack.c.b16 %v540, %v536
  %v597 = vpack.c.b16 %v541, %v537
  %v598 = vpack.c.b16 %v542, %v538
  %v599 = vpack.c.b16 %v543, %v539
  %v600 = vpack.c.b16 %v548, %v544
  %v601 = vpack.c.b16 %v549, %v545
  %v602 = vpack.c.b16 %v550, %v546
  %v603 = vpack.c.b16 %v551, %v547
  %v604 = vpack.c.b16 %v556, %v552
  %v605 = vpack.c.b16 %v557, %v553
  %v606 = vpack.c.b16 %v558, %v554
  %v607 = vpack.c.b16 %v559, %v555
  %v608 = vpack.c.b16 %v564, %v560
  %v609 = vpack.c.b16 %v565, %v561
  %v610 = vpack.c.b16 %v566, %v562
  %v611 = vpack.c.b16 %v567, %v563
  %v612 = vpack.c.b16 %v572, %v568
  %v613 = vpack.c.b16 %v573, %v569
  %v614 = vpack.c.b16 %v574, %v570
  %v615 = vpack.c.b16 %v575, %v571
  %v616 = vpack.c.b16 %v580, %v576
  %v617 = vpack.c.b16 %v581, %v577
  %v618 = vpack.c.b16 %v582, %v578
  %v619 = vpack.c.b16 %v583, %v579
  %v620 = vpack.c.b16 %v588, %v584
  %v621 = vpack.c.b16 %v589, %v585
  %v622 = vpack.c.b16 %v590, %v586
  %v623 = vpack.c.b16 %v591, %v587
  %656 = vmatprep.subr.bf16.mxu0 %v593
  %657 = vmatpush1.bf16.msra.mxu0 %v592
  %658 = vmatprep.subr.bf16.mxu0 %v597
  %659 = vmatpush1.bf16.msra.mxu0 %v596
  %660 = vmatprep.subr.bf16.mxu0 %v601
  %661 = vmatpush1.bf16.msra.mxu0 %v600
  %662 = vmatprep.subr.bf16.mxu0 %v605
  %663 = vmatpush1.bf16.msra.mxu0 %v604
  %664 = vmatprep.subr.bf16.mxu0 %v609
  %665 = vmatpush1.bf16.msra.mxu0 %v608
  %666 = vmatprep.subr.bf16.mxu0 %v613
  %667 = vmatpush1.bf16.msra.mxu0 %v612
  %668 = vmatprep.subr.bf16.mxu0 %v617
  %669 = vmatpush1.bf16.msra.mxu0 %v616
  %670 = vmatprep.subr.bf16.mxu0 %v621
  %671 = vmatpush1.bf16.msra.mxu0 %v620
  %672 = vmatprep.subr.bf16.mxu0 0
  %673 = vmatpush1.bf16.msra.mxu0 0
  %674 = vmatprep.subr.bf16.mxu0 0
  %675 = vmatpush1.bf16.msra.mxu0 0
  %676 = vmatprep.subr.bf16.mxu0 0
  %677 = vmatpush1.bf16.msra.mxu0 0
  %678 = vmatprep.subr.bf16.mxu0 0
  %679 = vmatpush1.bf16.msra.mxu0 0
  %680 = vmatprep.subr.bf16.mxu0 0
  %681 = vmatpush1.bf16.msra.mxu0 0
  %682 = vmatprep.subr.bf16.mxu0 0
  %683 = vmatpush1.bf16.msra.mxu0 0
  %684 = vmatprep.subr.bf16.mxu0 0
  %685 = vmatpush1.bf16.msra.mxu0 0
  %686 = vmatprep.subr.bf16.mxu0 0
  %687 = vmatpush1.bf16.msra.mxu0 0
  %688 = vmatprep.mubr.bf16.mxu0 0
  %689 = vmatmul.mubr.bf16.gmra.mrb[0].mxu0 %v463
  %v690 = vpop.f32.mrb[0].mxu0
  %v691 = vadd.f32 0.0, %v690
  %v692 = vpop.f32.mrb[0].mxu0
  %v693 = vadd.f32 0.0, %v692
  %v694 = vpop.f32.mrb[0].mxu0
  %v695 = vpop.f32.mrb[0].mxu0
  %696 = vdwg.mxu0
  %697 = vmatprep.subr.bf16.mxu0 %v595
  %698 = vmatpush1.bf16.msra.mxu0 %v594
  %699 = vmatprep.subr.bf16.mxu0 %v599
  %700 = vmatpush1.bf16.msra.mxu0 %v598
  %701 = vmatprep.subr.bf16.mxu0 %v603
  %702 = vmatpush1.bf16.msra.mxu0 %v602
  %703 = vmatprep.subr.bf16.mxu0 %v607
  %704 = vmatpush1.bf16.msra.mxu0 %v606
  %705 = vmatprep.subr.bf16.mxu0 %v611
  %706 = vmatpush1.bf16.msra.mxu0 %v610
  %707 = vmatprep.subr.bf16.mxu0 %v615
  %708 = vmatpush1.bf16.msra.mxu0 %v614
  %709 = vmatprep.subr.bf16.mxu0 %v619
  %710 = vmatpush1.bf16.msra.mxu0 %v618
  %711 = vmatprep.subr.bf16.mxu0 %v623
  %712 = vmatpush1.bf16.msra.mxu0 %v622
  %713 = vmatprep.subr.bf16.mxu0 0
  %714 = vmatpush1.bf16.msra.mxu0 0
  %715 = vmatprep.subr.bf16.mxu0 0
  %716 = vmatpush1.bf16.msra.mxu0 0
  %717 = vmatprep.subr.bf16.mxu0 0
  %718 = vmatpush1.bf16.msra.mxu0 0
  %719 = vmatprep.subr.bf16.mxu0 0
  %720 = vmatpush1.bf16.msra.mxu0 0
  %721 = vmatprep.subr.bf16.mxu0 0
  %722 = vmatpush1.bf16.msra.mxu0 0
  %723 = vmatprep.subr.bf16.mxu0 0
  %724 = vmatpush1.bf16.msra.mxu0 0
  %725 = vmatprep.subr.bf16.mxu0 0
  %726 = vmatpush1.bf16.msra.mxu0 0
  %727 = vmatprep.subr.bf16.mxu0 0
  %728 = vmatpush1.bf16.msra.mxu0 0
  %729 = vmatprep.mubr.bf16.mxu0 0
  %730 = vmatmul.mubr.bf16.gmra.mrb[0].mxu0 %v463
  %v731 = vpop.f32.mrb[0].mxu0
  %v732 = vadd.f32 0.0, %v731
  %v733 = vpop.f32.mrb[0].mxu0
  %v734 = vadd.f32 0.0, %v733
  %v735 = vpop.f32.mrb[0].mxu0
  %v736 = vpop.f32.mrb[0].mxu0
  %737 = vdwg.mxu0
  %v738 = vadd.f32 %v459, %v691
  %v739 = vadd.f32 %v460, %v693
  %v740 = vadd.f32 %v461, %v732
  %v741 = vadd.f32 %v462, %v734
  %v742 = vxor.u32 %v738, 2147483648
  %v743 = vxor.u32 %v739, 2147483648
  %v744 = vxor.u32 %v740, 2147483648
  %v745 = vmul.f32 %v742, 1.442695
  %v746 = vpow.pop %v745
  %v747 = vmul.f32 %v743, 1.442695
  %v748 = vpow.pop %v747
  %v749 = vmul.f32 %v744, 1.442695
  %v750 = vpow.pop %v749
  %v751 = vadd.f32 %v746, 1.0
  %v752 = vadd.f32 %v748, 1.0
  %v753 = vadd.f32 %v750, 1.0
  %v754 = vrcp.pop %v751
  %v755 = vmul.f32 1.0, %v754
  %v756 = vrcp.pop %v752
  %v757 = vmul.f32 1.0, %v756
  %v758 = vrcp.pop %v753
  %v759 = vmul.f32 1.0, %v758
  %v760 = vtanh.pop %v741
  %v761 = vmul.f32 %v757, %v455
  %v762 = vmul.f32 %v755, %v760
  %v763 = vadd.f32 %v761, %v762
  %v764 = vtanh.pop %v763
  %v765 = vmul.f32 %v759, %v764
  %s766 = smul.u32 1, 4
  %s767 = smul.addr %s766, 8
  %s768 = scalar_lea.vmem [#allocation4], %s767
  %v769 = vld [vmem:[%s768] sm:$0xff]
  %v770 = vld [vmem:[%s768 + $0x8] sm:$0xff]
  %v771 = vld [vmem:[%s768 + $0x10] sm:$0xff]
  %v772 = vld [vmem:[%s768 + $0x18] sm:$0xff]
  %v773 = vpack.c.bf16 %v765, %v765
  %774 = vmatprep.subr.bf16.mxu0 %v593
  %775 = vmatpush1.bf16.msra.mxu0 %v592
  %776 = vmatprep.subr.bf16.mxu0 %v597
  %777 = vmatpush1.bf16.msra.mxu0 %v596
  %778 = vmatprep.subr.bf16.mxu0 %v601
  %779 = vmatpush1.bf16.msra.mxu0 %v600
  %780 = vmatprep.subr.bf16.mxu0 %v605
  %781 = vmatpush1.bf16.msra.mxu0 %v604
  %782 = vmatprep.subr.bf16.mxu0 %v609
  %783 = vmatpush1.bf16.msra.mxu0 %v608
  %784 = vmatprep.subr.bf16.mxu0 %v613
  %785 = vmatpush1.bf16.msra.mxu0 %v612
  %786 = vmatprep.subr.bf16.mxu0 %v617
  %787 = vmatpush1.bf16.msra.mxu0 %v616
  %788 = vmatprep.subr.bf16.mxu0 %v621
  %789 = vmatpush1.bf16.msra.mxu0 %v620
  %790 = vmatprep.subr.bf16.mxu0 0
  %791 = vmatpush1.bf16.msra.mxu0 0
  %792 = vmatprep.subr.bf16.mxu0 0
  %793 = vmatpush1.bf16.msra.mxu0 0
  %794 = vmatprep.subr.bf16.mxu0 0
  %795 = vmatpush1.bf16.msra.mxu0 0
  %796 = vmatprep.subr.bf16.mxu0 0
  %797 = vmatpush1.bf16.msra.mxu0 0
  %798 = vmatprep.subr.bf16.mxu0 0
  %799 = vmatpush1.bf16.msra.mxu0 0
  %800 = vmatprep.subr.bf16.mxu0 0
  %801 = vmatpush1.bf16.msra.mxu0 0
  %802 = vmatprep.subr.bf16.mxu0 0
  %803 = vmatpush1.bf16.msra.mxu0 0
  %804 = vmatprep.subr.bf16.mxu0 0
  %805 = vmatpush1.bf16.msra.mxu0 0
  %806 = vmatprep.mubr.bf16.mxu0 0
  %807 = vmatmul.mubr.bf16.gmra.mrb[0].mxu0 %v773
  %v808 = vpop.f32.mrb[0].mxu0
  %v809 = vadd.f32 0.0, %v808
  %v810 = vpop.f32.mrb[0].mxu0
  %v811 = vadd.f32 0.0, %v810
  %v812 = vpop.f32.mrb[0].mxu0
  %v813 = vpop.f32.mrb[0].mxu0
  %814 = vdwg.mxu0
  %815 = vmatprep.subr.bf16.mxu0 %v595
  %816 = vmatpush1.bf16.msra.mxu0 %v594
  %817 = vmatprep.subr.bf16.mxu0 %v599
  %818 = vmatpush1.bf16.msra.mxu0 %v598
  %819 = vmatprep.subr.bf16.mxu0 %v603
  %820 = vmatpush1.bf16.msra.mxu0 %v602
  %821 = vmatprep.subr.bf16.mxu0 %v607
  %822 = vmatpush1.bf16.msra.mxu0 %v606
  %823 = vmatprep.subr.bf16.mxu0 %v611
  %824 = vmatpush1.bf16.msra.mxu0 %v610
  %825 = vmatprep.subr.bf16.mxu0 %v615
  %826 = vmatpush1.bf16.msra.mxu0 %v614
  %827 = vmatprep.subr.bf16.mxu0 %v619
  %828 = vmatpush1.bf16.msra.mxu0 %v618
  %829 = vmatprep.subr.bf16.mxu0 %v623
  %830 = vmatpush1.bf16.msra.mxu0 %v622
  %831 = vmatprep.subr.bf16.mxu0 0
  %832 = vmatpush1.bf16.msra.mxu0 0
  %833 = vmatprep.subr.bf16.mxu0 0
  %834 = vmatpush1.bf16.msra.mxu0 0
  %835 = vmatprep.subr.bf16.mxu0 0
  %836 = vmatpush1.bf16.msra.mxu0 0
  %837 = vmatprep.subr.bf16.mxu0 0
  %838 = vmatpush1.bf16.msra.mxu0 0
  %839 = vmatprep.subr.bf16.mxu0 0
  %840 = vmatpush1.bf16.msra.mxu0 0
  %841 = vmatprep.subr.bf16.mxu0 0
  %842 = vmatpush1.bf16.msra.mxu0 0
  %843 = vmatprep.subr.bf16.mxu0 0
  %844 = vmatpush1.bf16.msra.mxu0 0
  %845 = vmatprep.subr.bf16.mxu0 0
  %846 = vmatpush1.bf16.msra.mxu0 0
  %847 = vmatprep.mubr.bf16.mxu0 0
  %848 = vmatmul.mubr.bf16.gmra.mrb[0].mxu0 %v773
  %v849 = vpop.f32.mrb[0].mxu0
  %v850 = vadd.f32 0.0, %v849
  %v851 = vpop.f32.mrb[0].mxu0
  %v852 = vadd.f32 0.0, %v851
  %v853 = vpop.f32.mrb[0].mxu0
  %v854 = vpop.f32.mrb[0].mxu0
  %855 = vdwg.mxu0
  %v856 = vadd.f32 %v769, %v809
  %v857 = vadd.f32 %v770, %v811
  %v858 = vadd.f32 %v771, %v850
  %v859 = vadd.f32 %v772, %v852
  %v860 = vxor.u32 %v856, 2147483648
  %v861 = vxor.u32 %v857, 2147483648
  %v862 = vxor.u32 %v858, 2147483648
  %v863 = vmul.f32 %v860, 1.442695
  %v864 = vpow.pop %v863
  %v865 = vmul.f32 %v861, 1.442695
  %v866 = vpow.pop %v865
  %v867 = vmul.f32 %v862, 1.442695
  %v868 = vpow.pop %v867
  %v869 = vadd.f32 %v864, 1.0
  %v870 = vadd.f32 %v866, 1.0
  %v871 = vadd.f32 %v868, 1.0
  %v872 = vrcp.pop %v869
  %v873 = vmul.f32 1.0, %v872
  %v874 = vrcp.pop %v870
  %v875 = vmul.f32 1.0, %v874
  %v876 = vrcp.pop %v871
  %v877 = vmul.f32 1.0, %v876
  %v878 = vtanh.pop %v859
  %v879 = vmul.f32 %v875, %v763
  %v880 = vmul.f32 %v873, %v878
  %v881 = vadd.f32 %v879, %v880
  %v882 = vtanh.pop %v881
  %v883 = vmul.f32 %v877, %v882
  %s884 = smul.u32 2, 4
  %s885 = smul.addr %s884, 8
  %s886 = scalar_lea.vmem [#allocation4], %s885
  %v887 = vld [vmem:[%s886] sm:$0xff]
  %v888 = vld [vmem:[%s886 + $0x8] sm:$0xff]
  %v889 = vld [vmem:[%s886 + $0x10] sm:$0xff]
  %v890 = vld [vmem:[%s886 + $0x18] sm:$0xff]
  %v891 = vpack.c.bf16 %v883, %v883
  %892 = vmatprep.subr.bf16.mxu0 %v593
  %893 = vmatpush1.bf16.msra.mxu0 %v592
  %894 = vmatprep.subr.bf16.mxu0 %v597
  %895 = vmatpush1.bf16.msra.mxu0 %v596
  %896 = vmatprep.subr.bf16.mxu0 %v601
  %897 = vmatpush1.bf16.msra.mxu0 %v600
  %898 = vmatprep.subr.bf16.mxu0 %v605
  %899 = vmatpush1.bf16.msra.mxu0 %v604
  %900 = vmatprep.subr.bf16.mxu0 %v609
  %901 = vmatpush1.bf16.msra.mxu0 %v608
  %902 = vmatprep.subr.bf16.mxu0 %v613
  %903 = vmatpush1.bf16.msra.mxu0 %v612
  %904 = vmatprep.subr.bf16.mxu0 %v617
  %905 = vmatpush1.bf16.msra.mxu0 %v616
  %906 = vmatprep.subr.bf16.mxu0 %v621
  %907 = vmatpush1.bf16.msra.mxu0 %v620
  %908 = vmatprep.subr.bf16.mxu0 0
  %909 = vmatpush1.bf16.msra.mxu0 0
  %910 = vmatprep.subr.bf16.mxu0 0
  %911 = vmatpush1.bf16.msra.mxu0 0
  %912 = vmatprep.subr.bf16.mxu0 0
  %913 = vmatpush1.bf16.msra.mxu0 0
  %914 = vmatprep.subr.bf16.mxu0 0
  %915 = vmatpush1.bf16.msra.mxu0 0
  %916 = vmatprep.subr.bf16.mxu0 0
  %917 = vmatpush1.bf16.msra.mxu0 0
  %918 = vmatprep.subr.bf16.mxu0 0
  %919 = vmatpush1.bf16.msra.mxu0 0
  %920 = vmatprep.subr.bf16.mxu0 0
  %921 = vmatpush1.bf16.msra.mxu0 0
  %922 = vmatprep.subr.bf16.mxu0 0
  %923 = vmatpush1.bf16.msra.mxu0 0
  %924 = vmatprep.mubr.bf16.mxu0 0
  %925 = vmatmul.mubr.bf16.gmra.mrb[0].mxu0 %v891
  %v926 = vpop.f32.mrb[0].mxu0
  %v927 = vadd.f32 0.0, %v926
  %v928 = vpop.f32.mrb[0].mxu0
  %v929 = vadd.f32 0.0, %v928
  %v930 = vpop.f32.mrb[0].mxu0
  %v931 = vpop.f32.mrb[0].mxu0
  %932 = vdwg.mxu0
  %933 = vmatprep.subr.bf16.mxu0 %v595
  %934 = vmatpush1.bf16.msra.mxu0 %v594
  %935 = vmatprep.subr.bf16.mxu0 %v599
  %936 = vmatpush1.bf16.msra.mxu0 %v598
  %937 = vmatprep.subr.bf16.mxu0 %v603
  %938 = vmatpush1.bf16.msra.mxu0 %v602
  %939 = vmatprep.subr.bf16.mxu0 %v607
  %940 = vmatpush1.bf16.msra.mxu0 %v606
  %941 = vmatprep.subr.bf16.mxu0 %v611
  %942 = vmatpush1.bf16.msra.mxu0 %v610
  %943 = vmatprep.subr.bf16.mxu0 %v615
  %944 = vmatpush1.bf16.msra.mxu0 %v614
  %945 = vmatprep.subr.bf16.mxu0 %v619
  %946 = vmatpush1.bf16.msra.mxu0 %v618
  %947 = vmatprep.subr.bf16.mxu0 %v623
  %948 = vmatpush1.bf16.msra.mxu0 %v622
  %949 = vmatprep.subr.bf16.mxu0 0
  %950 = vmatpush1.bf16.msra.mxu0 0
  %951 = vmatprep.subr.bf16.mxu0 0
  %952 = vmatpush1.bf16.msra.mxu0 0
  %953 = vmatprep.subr.bf16.mxu0 0
  %954 = vmatpush1.bf16.msra.mxu0 0
  %955 = vmatprep.subr.bf16.mxu0 0
  %956 = vmatpush1.bf16.msra.mxu0 0
  %957 = vmatprep.subr.bf16.mxu0 0
  %958 = vmatpush1.bf16.msra.mxu0 0
  %959 = vmatprep.subr.bf16.mxu0 0
  %960 = vmatpush1.bf16.msra.mxu0 0
  %961 = vmatprep.subr.bf16.mxu0 0
  %962 = vmatpush1.bf16.msra.mxu0 0
  %963 = vmatprep.subr.bf16.mxu0 0
  %964 = vmatpush1.bf16.msra.mxu0 0
  %965 = vmatprep.mubr.bf16.mxu0 0
  %966 = vmatmul.mubr.bf16.gmra.mrb[0].mxu0 %v891
  %v967 = vpop.f32.mrb[0].mxu0
  %v968 = vadd.f32 0.0, %v967
  %v969 = vpop.f32.mrb[0].mxu0
  %v970 = vadd.f32 0.0, %v969
  %v971 = vpop.f32.mrb[0].mxu0
  %v972 = vpop.f32.mrb[0].mxu0
  %973 = vdwg.mxu0
  %v974 = vadd.f32 %v887, %v927
  %v975 = vadd.f32 %v888, %v929
  %v976 = vadd.f32 %v889, %v968
  %v977 = vadd.f32 %v890, %v970
  %v978 = vxor.u32 %v974, 2147483648
  %v979 = vxor.u32 %v975, 2147483648
  %v980 = vxor.u32 %v976, 2147483648
  %v981 = vmul.f32 %v978, 1.442695
  %v982 = vpow.pop %v981
  %v983 = vmul.f32 %v979, 1.442695
  %v984 = vpow.pop %v983
  %v985 = vmul.f32 %v980, 1.442695
  %v986 = vpow.pop %v985
  %v987 = vadd.f32 %v982, 1.0
  %v988 = vadd.f32 %v984, 1.0
  %v989 = vadd.f32 %v986, 1.0
  %v990 = vrcp.pop %v987
  %v991 = vmul.f32 1.0, %v990
  %v992 = vrcp.pop %v988
  %v993 = vmul.f32 1.0, %v992
  %v994 = vrcp.pop %v989
  %v995 = vmul.f32 1.0, %v994
  %v996 = vtanh.pop %v977
  %v997 = vmul.f32 %v993, %v881
  %v998 = vmul.f32 %v991, %v996
  %v999 = vadd.f32 %v997, %v998
  %v1000 = vtanh.pop %v999
  %v1001 = vmul.f32 %v995, %v1000
  %s1002 = smul.u32 3, 4
  %s1003 = smul.addr %s1002, 8
  %s1004 = scalar_lea.vmem [#allocation4], %s1003
  %v1005 = vld [vmem:[%s1004] sm:$0xff]
  %v1006 = vld [vmem:[%s1004 + $0x8] sm:$0xff]
  %v1007 = vld [vmem:[%s1004 + $0x10] sm:$0xff]
  %v1008 = vld [vmem:[%s1004 + $0x18] sm:$0xff]
  %v1009 = vpack.c.bf16 %v1001, %v1001
  %1010 = vmatprep.subr.bf16.mxu0 %v593
  %1011 = vmatpush1.bf16.msra.mxu0 %v592
  %1012 = vmatprep.subr.bf16.mxu0 %v597
  %1013 = vmatpush1.bf16.msra.mxu0 %v596
  %1014 = vmatprep.subr.bf16.mxu0 %v601
  %1015 = vmatpush1.bf16.msra.mxu0 %v600
  %1016 = vmatprep.subr.bf16.mxu0 %v605
  %1017 = vmatpush1.bf16.msra.mxu0 %v604
  %1018 = vmatprep.subr.bf16.mxu0 %v609
  %1019 = vmatpush1.bf16.msra.mxu0 %v608
  %1020 = vmatprep.subr.bf16.mxu0 %v613
  %1021 = vmatpush1.bf16.msra.mxu0 %v612
  %1022 = vmatprep.subr.bf16.mxu0 %v617
  %1023 = vmatpush1.bf16.msra.mxu0 %v616
  %1024 = vmatprep.subr.bf16.mxu0 %v621
  %1025 = vmatpush1.bf16.msra.mxu0 %v620
  %1026 = vmatprep.subr.bf16.mxu0 0
  %1027 = vmatpush1.bf16.msra.mxu0 0
  %1028 = vmatprep.subr.bf16.mxu0 0
  %1029 = vmatpush1.bf16.msra.mxu0 0
  %1030 = vmatprep.subr.bf16.mxu0 0
  %1031 = vmatpush1.bf16.msra.mxu0 0
  %1032 = vmatprep.subr.bf16.mxu0 0
  %1033 = vmatpush1.bf16.msra.mxu0 0
  %1034 = vmatprep.subr.bf16.mxu0 0
  %1035 = vmatpush1.bf16.msra.mxu0 0
  %1036 = vmatprep.subr.bf16.mxu0 0
  %1037 = vmatpush1.bf16.msra.mxu0 0
  %1038 = vmatprep.subr.bf16.mxu0 0
  %1039 = vmatpush1.bf16.msra.mxu0 0
  %1040 = vmatprep.subr.bf16.mxu0 0
  %1041 = vmatpush1.bf16.msra.mxu0 0
  %1042 = vmatprep.mubr.bf16.mxu0 0
  %1043 = vmatmul.mubr.bf16.gmra.mrb[0].mxu0 %v1009
  %v1044 = vpop.f32.mrb[0].mxu0
  %v1045 = vadd.f32 0.0, %v1044
  %v1046 = vpop.f32.mrb[0].mxu0
  %v1047 = vadd.f32 0.0, %v1046
  %v1048 = vpop.f32.mrb[0].mxu0
  %v1049 = vpop.f32.mrb[0].mxu0
  %1050 = vdwg.mxu0
  %1051 = vmatprep.subr.bf16.mxu0 %v595
  %1052 = vmatpush1.bf16.msra.mxu0 %v594
  %1053 = vmatprep.subr.bf16.mxu0 %v599
  %1054 = vmatpush1.bf16.msra.mxu0 %v598
  %1055 = vmatprep.subr.bf16.mxu0 %v603
  %1056 = vmatpush1.bf16.msra.mxu0 %v602
  %1057 = vmatprep.subr.bf16.mxu0 %v607
  %1058 = vmatpush1.bf16.msra.mxu0 %v606
  %1059 = vmatprep.subr.bf16.mxu0 %v611
  %1060 = vmatpush1.bf16.msra.mxu0 %v610
  %1061 = vmatprep.subr.bf16.mxu0 %v615
  %1062 = vmatpush1.bf16.msra.mxu0 %v614
  %1063 = vmatprep.subr.bf16.mxu0 %v619
  %1064 = vmatpush1.bf16.msra.mxu0 %v618
  %1065 = vmatprep.subr.bf16.mxu0 %v623
  %1066 = vmatpush1.bf16.msra.mxu0 %v622
  %1067 = vmatprep.subr.bf16.mxu0 0
  %1068 = vmatpush1.bf16.msra.mxu0 0
  %1069 = vmatprep.subr.bf16.mxu0 0
  %1070 = vmatpush1.bf16.msra.mxu0 0
  %1071 = vmatprep.subr.bf16.mxu0 0
  %1072 = vmatpush1.bf16.msra.mxu0 0
  %1073 = vmatprep.subr.bf16.mxu0 0
  %1074 = vmatpush1.bf16.msra.mxu0 0
  %1075 = vmatprep.subr.bf16.mxu0 0
  %1076 = vmatpush1.bf16.msra.mxu0 0
  %1077 = vmatprep.subr.bf16.mxu0 0
  %1078 = vmatpush1.bf16.msra.mxu0 0
  %1079 = vmatprep.subr.bf16.mxu0 0
  %1080 = vmatpush1.bf16.msra.mxu0 0
  %1081 = vmatprep.subr.bf16.mxu0 0
  %1082 = vmatpush1.bf16.msra.mxu0 0
  %1083 = vmatprep.mubr.bf16.mxu0 0
  %1084 = vmatmul.mubr.bf16.gmra.mrb[0].mxu0 %v1009
  %v1085 = vpop.f32.mrb[0].mxu0
  %v1086 = vadd.f32 0.0, %v1085
  %v1087 = vpop.f32.mrb[0].mxu0
  %v1088 = vadd.f32 0.0, %v1087
  %v1089 = vpop.f32.mrb[0].mxu0
  %v1090 = vpop.f32.mrb[0].mxu0
  %1091 = vdwg.mxu0
  %v1092 = vadd.f32 %v1005, %v1045
  %v1093 = vadd.f32 %v1006, %v1047
  %v1094 = vadd.f32 %v1007, %v1086
  %v1095 = vadd.f32 %v1008, %v1088
  %v1096 = vxor.u32 %v1092, 2147483648
  %v1097 = vxor.u32 %v1093, 2147483648
  %v1098 = vxor.u32 %v1094, 2147483648
  %v1099 = vmul.f32 %v1096, 1.442695
  %v1100 = vpow.pop %v1099
  %v1101 = vmul.f32 %v1097, 1.442695
  %v1102 = vpow.pop %v1101
  %v1103 = vmul.f32 %v1098, 1.442695
  %v1104 = vpow.pop %v1103
  %v1105 = vadd.f32 %v1100, 1.0
  %v1106 = vadd.f32 %v1102, 1.0
  %v1107 = vadd.f32 %v1104, 1.0
  %v1108 = vrcp.pop %v1105
  %v1109 = vmul.f32 1.0, %v1108
  %v1110 = vrcp.pop %v1106
  %v1111 = vmul.f32 1.0, %v1110
  %v1112 = vrcp.pop %v1107
  %v1113 = vmul.f32 1.0, %v1112
  %v1114 = vtanh.pop %v1095
  %v1115 = vmul.f32 %v1111, %v999
  %v1116 = vmul.f32 %v1109, %v1114
  %v1117 = vadd.f32 %v1115, %v1116
  %v1118 = vtanh.pop %v1117
  %v1119 = vmul.f32 %v1113, %v1118
  %s1120 = smul.u32 4, 4
  %s1121 = smul.addr %s1120, 8
  %s1122 = scalar_lea.vmem [#allocation4], %s1121
  %v1123 = vld [vmem:[%s1122] sm:$0xff]
  %v1124 = vld [vmem:[%s1122 + $0x8] sm:$0xff]
  %v1125 = vld [vmem:[%s1122 + $0x10] sm:$0xff]
  %v1126 = vld [vmem:[%s1122 + $0x18] sm:$0xff]
  %v1127 = vpack.c.bf16 %v1119, %v1119
  %1128 = vmatprep.subr.bf16.mxu0 %v593
  %1129 = vmatpush1.bf16.msra.mxu0 %v592
  %1130 = vmatprep.subr.bf16.mxu0 %v597
  %1131 = vmatpush1.bf16.msra.mxu0 %v596
  %1132 = vmatprep.subr.bf16.mxu0 %v601
  %1133 = vmatpush1.bf16.msra.mxu0 %v600
  %1134 = vmatprep.subr.bf16.mxu0 %v605
  %1135 = vmatpush1.bf16.msra.mxu0 %v604
  %1136 = vmatprep.subr.bf16.mxu0 %v609
  %1137 = vmatpush1.bf16.msra.mxu0 %v608
  %1138 = vmatprep.subr.bf16.mxu0 %v613
  %1139 = vmatpush1.bf16.msra.mxu0 %v612
  %1140 = vmatprep.subr.bf16.mxu0 %v617
  %1141 = vmatpush1.bf16.msra.mxu0 %v616
  %1142 = vmatprep.subr.bf16.mxu0 %v621
  %1143 = vmatpush1.bf16.msra.mxu0 %v620
  %1144 = vmatprep.subr.bf16.mxu0 0
  %1145 = vmatpush1.bf16.msra.mxu0 0
  %1146 = vmatprep.subr.bf16.mxu0 0
  %1147 = vmatpush1.bf16.msra.mxu0 0
  %1148 = vmatprep.subr.bf16.mxu0 0
  %1149 = vmatpush1.bf16.msra.mxu0 0
  %1150 = vmatprep.subr.bf16.mxu0 0
  %1151 = vmatpush1.bf16.msra.mxu0 0
  %1152 = vmatprep.subr.bf16.mxu0 0
  %1153 = vmatpush1.bf16.msra.mxu0 0
  %1154 = vmatprep.subr.bf16.mxu0 0
  %1155 = vmatpush1.bf16.msra.mxu0 0
  %1156 = vmatprep.subr.bf16.mxu0 0
  %1157 = vmatpush1.bf16.msra.mxu0 0
  %1158 = vmatprep.subr.bf16.mxu0 0
  %1159 = vmatpush1.bf16.msra.mxu0 0
  %1160 = vmatprep.mubr.bf16.mxu0 0
  %1161 = vmatmul.mubr.bf16.gmra.mrb[0].mxu0 %v1127
  %v1162 = vpop.f32.mrb[0].mxu0
  %v1163 = vadd.f32 0.0, %v1162
  %v1164 = vpop.f32.mrb[0].mxu0
  %v1165 = vadd.f32 0.0, %v1164
  %v1166 = vpop.f32.mrb[0].mxu0
  %v1167 = vpop.f32.mrb[0].mxu0
  %1168 = vdwg.mxu0
  %1169 = vmatprep.subr.bf16.mxu0 %v595
  %1170 = vmatpush1.bf16.msra.mxu0 %v594
  %1171 = vmatprep.subr.bf16.mxu0 %v599
  %1172 = vmatpush1.bf16.msra.mxu0 %v598
  %1173 = vmatprep.subr.bf16.mxu0 %v603
  %1174 = vmatpush1.bf16.msra.mxu0 %v602
  %1175 = vmatprep.subr.bf16.mxu0 %v607
  %1176 = vmatpush1.bf16.msra.mxu0 %v606
  %1177 = vmatprep.subr.bf16.mxu0 %v611
  %1178 = vmatpush1.bf16.msra.mxu0 %v610
  %1179 = vmatprep.subr.bf16.mxu0 %v615
  %1180 = vmatpush1.bf16.msra.mxu0 %v614
  %1181 = vmatprep.subr.bf16.mxu0 %v619
  %1182 = vmatpush1.bf16.msra.mxu0 %v618
  %1183 = vmatprep.subr.bf16.mxu0 %v623
  %1184 = vmatpush1.bf16.msra.mxu0 %v622
  %1185 = vmatprep.subr.bf16.mxu0 0
  %1186 = vmatpush1.bf16.msra.mxu0 0
  %1187 = vmatprep.subr.bf16.mxu0 0
  %1188 = vmatpush1.bf16.msra.mxu0 0
  %1189 = vmatprep.subr.bf16.mxu0 0
  %1190 = vmatpush1.bf16.msra.mxu0 0
  %1191 = vmatprep.subr.bf16.mxu0 0
  %1192 = vmatpush1.bf16.msra.mxu0 0
  %1193 = vmatprep.subr.bf16.mxu0 0
  %1194 = vmatpush1.bf16.msra.mxu0 0
  %1195 = vmatprep.subr.bf16.mxu0 0
  %1196 = vmatpush1.bf16.msra.mxu0 0
  %1197 = vmatprep.subr.bf16.mxu0 0
  %1198 = vmatpush1.bf16.msra.mxu0 0
  %1199 = vmatprep.subr.bf16.mxu0 0
  %1200 = vmatpush1.bf16.msra.mxu0 0
  %1201 = vmatprep.mubr.bf16.mxu0 0
  %1202 = vmatmul.mubr.bf16.gmra.mrb[0].mxu0 %v1127
  %v1203 = vpop.f32.mrb[0].mxu0
  %v1204 = vadd.f32 0.0, %v1203
  %v1205 = vpop.f32.mrb[0].mxu0
  %v1206 = vadd.f32 0.0, %v1205
  %v1207 = vpop.f32.mrb[0].mxu0
  %v1208 = vpop.f32.mrb[0].mxu0
  %1209 = vdwg.mxu0
  %v1210 = vadd.f32 %v1123, %v1163
  %v1211 = vadd.f32 %v1124, %v1165
  %v1212 = vadd.f32 %v1125, %v1204
  %v1213 = vadd.f32 %v1126, %v1206
  %v1214 = vxor.u32 %v1210, 2147483648
  %v1215 = vxor.u32 %v1211, 2147483648
  %v1216 = vxor.u32 %v1212, 2147483648
  %v1217 = vmul.f32 %v1214, 1.442695
  %v1218 = vpow.pop %v1217
  %v1219 = vmul.f32 %v1215, 1.442695
  %v1220 = vpow.pop %v1219
  %v1221 = vmul.f32 %v1216, 1.442695
  %v1222 = vpow.pop %v1221
  %v1223 = vadd.f32 %v1218, 1.0
  %v1224 = vadd.f32 %v1220, 1.0
  %v1225 = vadd.f32 %v1222, 1.0
  %v1226 = vrcp.pop %v1223
  %v1227 = vmul.f32 1.0, %v1226
  %v1228 = vrcp.pop %v1224
  %v1229 = vmul.f32 1.0, %v1228
  %v1230 = vrcp.pop %v1225
  %v1231 = vmul.f32 1.0, %v1230
  %v1232 = vtanh.pop %v1213
  %v1233 = vmul.f32 %v1229, %v1117
  %v1234 = vmul.f32 %v1227, %v1232
  %v1235 = vadd.f32 %v1233, %v1234
  %v1236 = vtanh.pop %v1235
  %v1237 = vmul.f32 %v1231, %v1236
  %s1238 = smul.u32 5, 4
  %s1239 = smul.addr %s1238, 8
  %s1240 = scalar_lea.vmem [#allocation4], %s1239
  %v1241 = vld [vmem:[%s1240] sm:$0xff]
  %v1242 = vld [vmem:[%s1240 + $0x8] sm:$0xff]
  %v1243 = vld [vmem:[%s1240 + $0x10] sm:$0xff]
  %v1244 = vld [vmem:[%s1240 + $0x18] sm:$0xff]
  %v1245 = vpack.c.bf16 %v1237, %v1237
  %1246 = vmatprep.subr.bf16.mxu0 %v593
  %1247 = vmatpush1.bf16.msra.mxu0 %v592
  %1248 = vmatprep.subr.bf16.mxu0 %v597
  %1249 = vmatpush1.bf16.msra.mxu0 %v596
  %1250 = vmatprep.subr.bf16.mxu0 %v601
  %1251 = vmatpush1.bf16.msra.mxu0 %v600
  %1252 = vmatprep.subr.bf16.mxu0 %v605
  %1253 = vmatpush1.bf16.msra.mxu0 %v604
  %1254 = vmatprep.subr.bf16.mxu0 %v609
  %1255 = vmatpush1.bf16.msra.mxu0 %v608
  %1256 = vmatprep.subr.bf16.mxu0 %v613
  %1257 = vmatpush1.bf16.msra.mxu0 %v612
  %1258 = vmatprep.subr.bf16.mxu0 %v617
  %1259 = vmatpush1.bf16.msra.mxu0 %v616
  %1260 = vmatprep.subr.bf16.mxu0 %v621
  %1261 = vmatpush1.bf16.msra.mxu0 %v620
  %1262 = vmatprep.subr.bf16.mxu0 0
  %1263 = vmatpush1.bf16.msra.mxu0 0
  %1264 = vmatprep.subr.bf16.mxu0 0
  %1265 = vmatpush1.bf16.msra.mxu0 0
  %1266 = vmatprep.subr.bf16.mxu0 0
  %1267 = vmatpush1.bf16.msra.mxu0 0
  %1268 = vmatprep.subr.bf16.mxu0 0
  %1269 = vmatpush1.bf16.msra.mxu0 0
  %1270 = vmatprep.subr.bf16.mxu0 0
  %1271 = vmatpush1.bf16.msra.mxu0 0
  %1272 = vmatprep.subr.bf16.mxu0 0
  %1273 = vmatpush1.bf16.msra.mxu0 0
  %1274 = vmatprep.subr.bf16.mxu0 0
  %1275 = vmatpush1.bf16.msra.mxu0 0
  %1276 = vmatprep.subr.bf16.mxu0 0
  %1277 = vmatpush1.bf16.msra.mxu0 0
  %1278 = vmatprep.mubr.bf16.mxu0 0
  %1279 = vmatmul.mubr.bf16.gmra.mrb[0].mxu0 %v1245
  %v1280 = vpop.f32.mrb[0].mxu0
  %v1281 = vadd.f32 0.0, %v1280
  %v1282 = vpop.f32.mrb[0].mxu0
  %v1283 = vadd.f32 0.0, %v1282
  %v1284 = vpop.f32.mrb[0].mxu0
  %v1285 = vpop.f32.mrb[0].mxu0
  %1286 = vdwg.mxu0
  %1287 = vmatprep.subr.bf16.mxu0 %v595
  %1288 = vmatpush1.bf16.msra.mxu0 %v594
  %1289 = vmatprep.subr.bf16.mxu0 %v599
  %1290 = vmatpush1.bf16.msra.mxu0 %v598
  %1291 = vmatprep.subr.bf16.mxu0 %v603
  %1292 = vmatpush1.bf16.msra.mxu0 %v602
  %1293 = vmatprep.subr.bf16.mxu0 %v607
  %1294 = vmatpush1.bf16.msra.mxu0 %v606
  %1295 = vmatprep.subr.bf16.mxu0 %v611
  %1296 = vmatpush1.bf16.msra.mxu0 %v610
  %1297 = vmatprep.subr.bf16.mxu0 %v615
  %1298 = vmatpush1.bf16.msra.mxu0 %v614
  %1299 = vmatprep.subr.bf16.mxu0 %v619
  %1300 = vmatpush1.bf16.msra.mxu0 %v618
  %1301 = vmatprep.subr.bf16.mxu0 %v623
  %1302 = vmatpush1.bf16.msra.mxu0 %v622
  %1303 = vmatprep.subr.bf16.mxu0 0
  %1304 = vmatpush1.bf16.msra.mxu0 0
  %1305 = vmatprep.subr.bf16.mxu0 0
  %1306 = vmatpush1.bf16.msra.mxu0 0
  %1307 = vmatprep.subr.bf16.mxu0 0
  %1308 = vmatpush1.bf16.msra.mxu0 0
  %1309 = vmatprep.subr.bf16.mxu0 0
  %1310 = vmatpush1.bf16.msra.mxu0 0
  %1311 = vmatprep.subr.bf16.mxu0 0
  %1312 = vmatpush1.bf16.msra.mxu0 0
  %1313 = vmatprep.subr.bf16.mxu0 0
  %1314 = vmatpush1.bf16.msra.mxu0 0
  %1315 = vmatprep.subr.bf16.mxu0 0
  %1316 = vmatpush1.bf16.msra.mxu0 0
  %1317 = vmatprep.subr.bf16.mxu0 0
  %1318 = vmatpush1.bf16.msra.mxu0 0
  %1319 = vmatprep.mubr.bf16.mxu0 0
  %1320 = vmatmul.mubr.bf16.gmra.mrb[0].mxu0 %v1245
  %v1321 = vpop.f32.mrb[0].mxu0
  %v1322 = vadd.f32 0.0, %v1321
  %v1323 = vpop.f32.mrb[0].mxu0
  %v1324 = vadd.f32 0.0, %v1323
  %v1325 = vpop.f32.mrb[0].mxu0
  %v1326 = vpop.f32.mrb[0].mxu0
  %1327 = vdwg.mxu0
  %v1328 = vadd.f32 %v1241, %v1281
  %v1329 = vadd.f32 %v1242, %v1283
  %v1330 = vadd.f32 %v1243, %v1322
  %v1331 = vadd.f32 %v1244, %v1324
  %v1332 = vxor.u32 %v1328, 2147483648
  %v1333 = vxor.u32 %v1329, 2147483648
  %v1334 = vxor.u32 %v1330, 2147483648
  %v1335 = vmul.f32 %v1332, 1.442695
  %v1336 = vpow.pop %v1335
  %v1337 = vmul.f32 %v1333, 1.442695
  %v1338 = vpow.pop %v1337
  %v1339 = vmul.f32 %v1334, 1.442695
  %v1340 = vpow.pop %v1339
  %v1341 = vadd.f32 %v1336, 1.0
  %v1342 = vadd.f32 %v1338, 1.0
  %v1343 = vadd.f32 %v1340, 1.0
  %v1344 = vrcp.pop %v1341
  %v1345 = vmul.f32 1.0, %v1344
  %v1346 = vrcp.pop %v1342
  %v1347 = vmul.f32 1.0, %v1346
  %v1348 = vrcp.pop %v1343
  %v1349 = vmul.f32 1.0, %v1348
  %v1350 = vtanh.pop %v1331
  %v1351 = vmul.f32 %v1347, %v1235
  %v1352 = vmul.f32 %v1345, %v1350
  %v1353 = vadd.f32 %v1351, %v1352
  %v1354 = vtanh.pop %v1353
  %v1355 = vmul.f32 %v1349, %v1354
  %s1356 = smul.u32 6, 4
  %s1357 = smul.addr %s1356, 8
  %s1358 = scalar_lea.vmem [#allocation4], %s1357
  %v1359 = vld [vmem:[%s1358] sm:$0xff]
  %v1360 = vld [vmem:[%s1358 + $0x8] sm:$0xff]
  %v1361 = vld [vmem:[%s1358 + $0x10] sm:$0xff]
  %v1362 = vld [vmem:[%s1358 + $0x18] sm:$0xff]
  %v1363 = vpack.c.bf16 %v1355, %v1355
  %1364 = vmatprep.subr.bf16.mxu0 %v593
  %1365 = vmatpush1.bf16.msra.mxu0 %v592
  %1366 = vmatprep.subr.bf16.mxu0 %v597
  %1367 = vmatpush1.bf16.msra.mxu0 %v596
  %1368 = vmatprep.subr.bf16.mxu0 %v601
  %1369 = vmatpush1.bf16.msra.mxu0 %v600
  %1370 = vmatprep.subr.bf16.mxu0 %v605
  %1371 = vmatpush1.bf16.msra.mxu0 %v604
  %1372 = vmatprep.subr.bf16.mxu0 %v609
  %1373 = vmatpush1.bf16.msra.mxu0 %v608
  %1374 = vmatprep.subr.bf16.mxu0 %v613
  %1375 = vmatpush1.bf16.msra.mxu0 %v612
  %1376 = vmatprep.subr.bf16.mxu0 %v617
  %1377 = vmatpush1.bf16.msra.mxu0 %v616
  %1378 = vmatprep.subr.bf16.mxu0 %v621
  %1379 = vmatpush1.bf16.msra.mxu0 %v620
  %1380 = vmatprep.subr.bf16.mxu0 0
  %1381 = vmatpush1.bf16.msra.mxu0 0
  %1382 = vmatprep.subr.bf16.mxu0 0
  %1383 = vmatpush1.bf16.msra.mxu0 0
  %1384 = vmatprep.subr.bf16.mxu0 0
  %1385 = vmatpush1.bf16.msra.mxu0 0
  %1386 = vmatprep.subr.bf16.mxu0 0
  %1387 = vmatpush1.bf16.msra.mxu0 0
  %1388 = vmatprep.subr.bf16.mxu0 0
  %1389 = vmatpush1.bf16.msra.mxu0 0
  %1390 = vmatprep.subr.bf16.mxu0 0
  %1391 = vmatpush1.bf16.msra.mxu0 0
  %1392 = vmatprep.subr.bf16.mxu0 0
  %1393 = vmatpush1.bf16.msra.mxu0 0
  %1394 = vmatprep.subr.bf16.mxu0 0
  %1395 = vmatpush1.bf16.msra.mxu0 0
  %1396 = vmatprep.mubr.bf16.mxu0 0
  %1397 = vmatmul.mubr.bf16.gmra.mrb[0].mxu0 %v1363
  %v1398 = vpop.f32.mrb[0].mxu0
  %v1399 = vadd.f32 0.0, %v1398
  %v1400 = vpop.f32.mrb[0].mxu0
  %v1401 = vadd.f32 0.0, %v1400
  %v1402 = vpop.f32.mrb[0].mxu0
  %v1403 = vpop.f32.mrb[0].mxu0
  %1404 = vdwg.mxu0
  %1405 = vmatprep.subr.bf16.mxu0 %v595
  %1406 = vmatpush1.bf16.msra.mxu0 %v594
  %1407 = vmatprep.subr.bf16.mxu0 %v599
  %1408 = vmatpush1.bf16.msra.mxu0 %v598
  %1409 = vmatprep.subr.bf16.mxu0 %v603
  %1410 = vmatpush1.bf16.msra.mxu0 %v602
  %1411 = vmatprep.subr.bf16.mxu0 %v607
  %1412 = vmatpush1.bf16.msra.mxu0 %v606
  %1413 = vmatprep.subr.bf16.mxu0 %v611
  %1414 = vmatpush1.bf16.msra.mxu0 %v610
  %1415 = vmatprep.subr.bf16.mxu0 %v615
  %1416 = vmatpush1.bf16.msra.mxu0 %v614
  %1417 = vmatprep.subr.bf16.mxu0 %v619
  %1418 = vmatpush1.bf16.msra.mxu0 %v618
  %1419 = vmatprep.subr.bf16.mxu0 %v623
  %1420 = vmatpush1.bf16.msra.mxu0 %v622
  %1421 = vmatprep.subr.bf16.mxu0 0
  %1422 = vmatpush1.bf16.msra.mxu0 0
  %1423 = vmatprep.subr.bf16.mxu0 0
  %1424 = vmatpush1.bf16.msra.mxu0 0
  %1425 = vmatprep.subr.bf16.mxu0 0
  %1426 = vmatpush1.bf16.msra.mxu0 0
  %1427 = vmatprep.subr.bf16.mxu0 0
  %1428 = vmatpush1.bf16.msra.mxu0 0
  %1429 = vmatprep.subr.bf16.mxu0 0
  %1430 = vmatpush1.bf16.msra.mxu0 0
  %1431 = vmatprep.subr.bf16.mxu0 0
  %1432 = vmatpush1.bf16.msra.mxu0 0
  %1433 = vmatprep.subr.bf16.mxu0 0
  %1434 = vmatpush1.bf16.msra.mxu0 0
  %1435 = vmatprep.subr.bf16.mxu0 0
  %1436 = vmatpush1.bf16.msra.mxu0 0
  %1437 = vmatprep.mubr.bf16.mxu0 0
  %1438 = vmatmul.mubr.bf16.gmra.mrb[0].mxu0 %v1363
  %v1439 = vpop.f32.mrb[0].mxu0
  %v1440 = vadd.f32 0.0, %v1439
  %v1441 = vpop.f32.mrb[0].mxu0
  %v1442 = vadd.f32 0.0, %v1441
  %v1443 = vpop.f32.mrb[0].mxu0
  %v1444 = vpop.f32.mrb[0].mxu0
  %1445 = vdwg.mxu0
  %v1446 = vadd.f32 %v1359, %v1399
  %v1447 = vadd.f32 %v1360, %v1401
  %v1448 = vadd.f32 %v1361, %v1440
  %v1449 = vadd.f32 %v1362, %v1442
  %v1450 = vxor.u32 %v1446, 2147483648
  %v1451 = vxor.u32 %v1447, 2147483648
  %v1452 = vxor.u32 %v1448, 2147483648
  %v1453 = vmul.f32 %v1450, 1.442695
  %v1454 = vpow.pop %v1453
  %v1455 = vmul.f32 %v1451, 1.442695
  %v1456 = vpow.pop %v1455
  %v1457 = vmul.f32 %v1452, 1.442695
  %v1458 = vpow.pop %v1457
  %v1459 = vadd.f32 %v1454, 1.0
  %v1460 = vadd.f32 %v1456, 1.0
  %v1461 = vadd.f32 %v1458, 1.0
  %v1462 = vrcp.pop %v1459
  %v1463 = vmul.f32 1.0, %v1462
  %v1464 = vrcp.pop %v1460
  %v1465 = vmul.f32 1.0, %v1464
  %v1466 = vrcp.pop %v1461
  %v1467 = vmul.f32 1.0, %v1466
  %v1468 = vtanh.pop %v1449
  %v1469 = vmul.f32 %v1465, %v1353
  %v1470 = vmul.f32 %v1463, %v1468
  %v1471 = vadd.f32 %v1469, %v1470
  %v1472 = vtanh.pop %v1471
  %v1473 = vmul.f32 %v1467, %v1472
  %s1474 = smul.u32 7, 4
  %s1475 = smul.addr %s1474, 8
  %s1476 = scalar_lea.vmem [#allocation4], %s1475
  %v1477 = vld [vmem:[%s1476] sm:$0xff]
  %v1478 = vld [vmem:[%s1476 + $0x8] sm:$0xff]
  %v1479 = vld [vmem:[%s1476 + $0x10] sm:$0xff]
  %v1480 = vld [vmem:[%s1476 + $0x18] sm:$0xff]
  %v1481 = vpack.c.bf16 %v1473, %v1473
  %1482 = vmatprep.subr.bf16.mxu0 %v593
  %1483 = vmatpush1.bf16.msra.mxu0 %v592
  %1484 = vmatprep.subr.bf16.mxu0 %v597
  %1485 = vmatpush1.bf16.msra.mxu0 %v596
  %1486 = vmatprep.subr.bf16.mxu0 %v601
  %1487 = vmatpush1.bf16.msra.mxu0 %v600
  %1488 = vmatprep.subr.bf16.mxu0 %v605
  %1489 = vmatpush1.bf16.msra.mxu0 %v604
  %1490 = vmatprep.subr.bf16.mxu0 %v609
  %1491 = vmatpush1.bf16.msra.mxu0 %v608
  %1492 = vmatprep.subr.bf16.mxu0 %v613
  %1493 = vmatpush1.bf16.msra.mxu0 %v612
  %1494 = vmatprep.subr.bf16.mxu0 %v617
  %1495 = vmatpush1.bf16.msra.mxu0 %v616
  %1496 = vmatprep.subr.bf16.mxu0 %v621
  %1497 = vmatpush1.bf16.msra.mxu0 %v620
  %1498 = vmatprep.subr.bf16.mxu0 0
  %1499 = vmatpush1.bf16.msra.mxu0 0
  %1500 = vmatprep.subr.bf16.mxu0 0
  %1501 = vmatpush1.bf16.msra.mxu0 0
  %1502 = vmatprep.subr.bf16.mxu0 0
  %1503 = vmatpush1.bf16.msra.mxu0 0
  %1504 = vmatprep.subr.bf16.mxu0 0
  %1505 = vmatpush1.bf16.msra.mxu0 0
  %1506 = vmatprep.subr.bf16.mxu0 0
  %1507 = vmatpush1.bf16.msra.mxu0 0
  %1508 = vmatprep.subr.bf16.mxu0 0
  %1509 = vmatpush1.bf16.msra.mxu0 0
  %1510 = vmatprep.subr.bf16.mxu0 0
  %1511 = vmatpush1.bf16.msra.mxu0 0
  %1512 = vmatprep.subr.bf16.mxu0 0
  %1513 = vmatpush1.bf16.msra.mxu0 0
  %1514 = vmatprep.mubr.bf16.mxu0 0
  %1515 = vmatmul.mubr.bf16.gmra.mrb[0].mxu0 %v1481
  %v1516 = vpop.f32.mrb[0].mxu0
  %v1517 = vadd.f32 0.0, %v1516
  %v1518 = vpop.f32.mrb[0].mxu0
  %v1519 = vadd.f32 0.0, %v1518
  %v1520 = vpop.f32.mrb[0].mxu0
  %v1521 = vpop.f32.mrb[0].mxu0
  %1522 = vdwg.mxu0
  %1523 = vmatprep.subr.bf16.mxu0 %v595
  %1524 = vmatpush1.bf16.msra.mxu0 %v594
  %1525 = vmatprep.subr.bf16.mxu0 %v599
  %1526 = vmatpush1.bf16.msra.mxu0 %v598
  %1527 = vmatprep.subr.bf16.mxu0 %v603
  %1528 = vmatpush1.bf16.msra.mxu0 %v602
  %1529 = vmatprep.subr.bf16.mxu0 %v607
  %1530 = vmatpush1.bf16.msra.mxu0 %v606
  %1531 = vmatprep.subr.bf16.mxu0 %v611
  %1532 = vmatpush1.bf16.msra.mxu0 %v610
  %1533 = vmatprep.subr.bf16.mxu0 %v615
  %1534 = vmatpush1.bf16.msra.mxu0 %v614
  %1535 = vmatprep.subr.bf16.mxu0 %v619
  %1536 = vmatpush1.bf16.msra.mxu0 %v618
  %1537 = vmatprep.subr.bf16.mxu0 %v623
  %1538 = vmatpush1.bf16.msra.mxu0 %v622
  %1539 = vmatprep.subr.bf16.mxu0 0
  %1540 = vmatpush1.bf16.msra.mxu0 0
  %1541 = vmatprep.subr.bf16.mxu0 0
  %1542 = vmatpush1.bf16.msra.mxu0 0
  %1543 = vmatprep.subr.bf16.mxu0 0
  %1544 = vmatpush1.bf16.msra.mxu0 0
  %1545 = vmatprep.subr.bf16.mxu0 0
  %1546 = vmatpush1.bf16.msra.mxu0 0
  %1547 = vmatprep.subr.bf16.mxu0 0
  %1548 = vmatpush1.bf16.msra.mxu0 0
  %1549 = vmatprep.subr.bf16.mxu0 0
  %1550 = vmatpush1.bf16.msra.mxu0 0
  %1551 = vmatprep.subr.bf16.mxu0 0
  %1552 = vmatpush1.bf16.msra.mxu0 0
  %1553 = vmatprep.subr.bf16.mxu0 0
  %1554 = vmatpush1.bf16.msra.mxu0 0
  %1555 = vmatprep.mubr.bf16.mxu0 0
  %1556 = vmatmul.mubr.bf16.gmra.mrb[0].mxu0 %v1481
  %v1557 = vpop.f32.mrb[0].mxu0
  %v1558 = vadd.f32 0.0, %v1557
  %v1559 = vpop.f32.mrb[0].mxu0
  %v1560 = vadd.f32 0.0, %v1559
  %v1561 = vpop.f32.mrb[0].mxu0
  %v1562 = vpop.f32.mrb[0].mxu0
  %1563 = vdwg.mxu0
  %v1564 = vadd.f32 %v1477, %v1517
  %v1565 = vadd.f32 %v1478, %v1519
  %v1566 = vadd.f32 %v1479, %v1558
  %v1567 = vadd.f32 %v1480, %v1560
  %v1568 = vxor.u32 %v1564, 2147483648
  %v1569 = vxor.u32 %v1565, 2147483648
  %v1570 = vxor.u32 %v1566, 2147483648
  %v1571 = vmul.f32 %v1568, 1.442695
  %v1572 = vpow.pop %v1571
  %v1573 = vmul.f32 %v1569, 1.442695
  %v1574 = vpow.pop %v1573
  %v1575 = vmul.f32 %v1570, 1.442695
  %v1576 = vpow.pop %v1575
  %v1577 = vadd.f32 %v1572, 1.0
  %v1578 = vadd.f32 %v1574, 1.0
  %v1579 = vadd.f32 %v1576, 1.0
  %v1580 = vrcp.pop %v1577
  %v1581 = vmul.f32 1.0, %v1580
  %v1582 = vrcp.pop %v1578
  %v1583 = vmul.f32 1.0, %v1582
  %v1584 = vrcp.pop %v1579
  %v1585 = vmul.f32 1.0, %v1584
  %v1586 = vtanh.pop %v1567
  %v1587 = vmul.f32 %v1583, %v1471
  %v1588 = vmul.f32 %v1581, %v1586
  %v1589 = vadd.f32 %v1587, %v1588
  %v1590 = vtanh.pop %v1589
  %v1591 = vmul.f32 %v1585, %v1590
  %1592 = vst [vmem:[#allocation2] sm:$0xff] %v1591
  %1593 = vst [vmem:[#allocation3] sm:$0xff] %v1589
  // Predicated region
  $region30: #{lstm_model_forward.1} parent=0 // pred_check
    %p1594 = pneg %p24
  $region31: #{lstm_model_forward.1} parent=0 // pred_check_branch
    %1596 = sbr.rel (%p1594) target = $region33
  $region32: #{lstm_model_forward.1} parent=0 // pred_region
    %v1597 = vld [vmem:[%s4] sm:$0xff]
    %v1598 = vld [vmem:[%s4 + $0x8] sm:$0xff]
    %v1599 = vld [vmem:[%s4 + $0x10] sm:$0xff]
    %v1600 = vld [vmem:[%s4 + $0x18] sm:$0xff]
    %v1601 = vld [vmem:[%s4 + $0x20] sm:$0xff]
    %v1602 = vld [vmem:[%s4 + $0x28] sm:$0xff]
    %v1603 = vld [vmem:[%s4 + $0x30] sm:$0xff]
    %v1604 = vld [vmem:[%s4 + $0x38] sm:$0xff]
    %v1605 = vld [vmem:[%s4 + $0x40] sm:$0xff]
    %v1606 = vld [vmem:[%s4 + $0x48] sm:$0xff]
    %v1607 = vld [vmem:[%s4 + $0x50] sm:$0xff]
    %v1608 = vld [vmem:[%s4 + $0x58] sm:$0xff]
    %v1609 = vld [vmem:[%s4 + $0x60] sm:$0xff]
    %v1610 = vld [vmem:[%s4 + $0x68] sm:$0xff]
    %v1611 = vld [vmem:[%s4 + $0x70] sm:$0xff]
    %v1612 = vld [vmem:[%s4 + $0x78] sm:$0xff]
    %v1613 = vld [vmem:[%s5] sm:$0x1]
    %v1615 = vlaneseq
    %v1616 = vshrl.u32 %v1615, 7
    %v1617 = vsub.s32 0, %v1616
    %v1618 = vrot.slane %v1613, %v1617
    %1620 = vmatprep.subr.mxu0 0.0
    %1621 = vmatpush1.msra.mxu0 %v1597
    %1622 = vmatprep.subr.mxu0 0.0
    %1623 = vmatpush1.msra.mxu0 %v1598
    %1624 = vmatprep.subr.mxu0 0.0
    %1625 = vmatpush1.msra.mxu0 %v1599
    %1626 = vmatprep.subr.mxu0 0.0
    %1627 = vmatpush1.msra.mxu0 %v1600
    %1628 = vmatprep.subr.mxu0 0.0
    %1629 = vmatpush1.msra.mxu0 %v1601
    %1630 = vmatprep.subr.mxu0 0.0
    %1631 = vmatpush1.msra.mxu0 %v1602
    %1632 = vmatprep.subr.mxu0 0.0
    %1633 = vmatpush1.msra.mxu0 %v1603
    %1634 = vmatprep.subr.mxu0 0.0
    %1635 = vmatpush1.msra.mxu0 %v1604
    %1636 = vmatprep.subr.mxu0 0.0
    %1637 = vmatpush1.msra.mxu0 %v1605
    %1638 = vmatprep.subr.mxu0 0.0
    %1639 = vmatpush1.msra.mxu0 %v1606
    %1640 = vmatprep.subr.mxu0 0.0
    %1641 = vmatpush1.msra.mxu0 %v1607
    %1642 = vmatprep.subr.mxu0 0.0
    %1643 = vmatpush1.msra.mxu0 %v1608
    %1644 = vmatprep.subr.mxu0 0.0
    %1645 = vmatpush1.msra.mxu0 %v1609
    %1646 = vmatprep.subr.mxu0 0.0
    %1647 = vmatpush1.msra.mxu0 %v1610
    %1648 = vmatprep.subr.mxu0 0.0
    %1649 = vmatpush1.msra.mxu0 %v1611
    %1650 = vmatprep.subr.mxu0 0.0
    %1651 = vmatpush1.msra.mxu0 %v1612
    %1652 = vmatprep.subr.mxu0 0.0
    %1653 = vmatpush1.msra.mxu0 0.0
    %1654 = vmatprep.subr.mxu0 0.0
    %1655 = vmatpush1.msra.mxu0 0.0
    %1656 = vmatprep.subr.mxu0 0.0
    %1657 = vmatpush1.msra.mxu0 0.0
    %1658 = vmatprep.subr.mxu0 0.0
    %1659 = vmatpush1.msra.mxu0 0.0
    %1660 = vmatprep.subr.mxu0 0.0
    %1661 = vmatpush1.msra.mxu0 0.0
    %1662 = vmatprep.subr.mxu0 0.0
    %1663 = vmatpush1.msra.mxu0 0.0
    %1664 = vmatprep.subr.mxu0 0.0
    %1665 = vmatpush1.msra.mxu0 0.0
    %1666 = vmatprep.subr.mxu0 0.0
    %1667 = vmatpush1.msra.mxu0 0.0
    %1668 = vmatprep.subr.mxu0 0.0
    %1669 = vmatpush1.msra.mxu0 0.0
    %1670 = vmatprep.subr.mxu0 0.0
    %1671 = vmatpush1.msra.mxu0 0.0
    %1672 = vmatprep.subr.mxu0 0.0
    %1673 = vmatpush1.msra.mxu0 0.0
    %1674 = vmatprep.subr.mxu0 0.0
    %1675 = vmatpush1.msra.mxu0 0.0
    %1676 = vmatprep.subr.mxu0 0.0
    %1677 = vmatpush1.msra.mxu0 0.0
    %1678 = vmatprep.subr.mxu0 0.0
    %1679 = vmatpush1.msra.mxu0 0.0
    %1680 = vmatprep.subr.mxu0 0.0
    %1681 = vmatpush1.msra.mxu0 0.0
    %1682 = vmatprep.subr.mxu0 0.0
    %1683 = vmatpush1.msra.mxu0 0.0
    %1684 = vmatprep.mubr.f32.mxu0 0.0
    %1685 = vmatmul.mubr.f32.gmra.mrb[0].mxu0 %v1591
    %v1686 = vpop.f32.mrb[0].mxu0
    %v1687 = vadd.f32 %v1618, %v1686
    %v1688 = vpop.f32.mrb[0].mxu0
    %1689 = vdwg.mxu0
    %v1690 = vxor.u32 %v1687, 2147483648
    %v1691 = vmul.f32 %v1690, 1.442695
    %v1692 = vpow.pop %v1691
    %v1693 = vadd.f32 %v1692, 1.0
    %v1694 = vrcp.pop %v1693
    %v1695 = vmul.f32 1.0, %v1694
    %1696 = vst [vmem:[%s6] sm:$0xff] %v1695
  $region33: #{lstm_model_forward.1} parent=0 // pred_fallthru
    _
  // Predicated region
  $region34: #{lstm_model_forward.1} parent=0 // pred_check
    _
  $region35: #{lstm_model_forward.1} parent=0 // pred_check_branch
    %1698 = sbr.rel (0) target = $region37
  $region36: #{lstm_model_forward.1} parent=0 // pred_region
    _
  $region37: #{lstm_model_forward.1} parent=0 // pred_fallthru
    _
  // Predicated region
  $region38: #{lstm_model_forward.1} parent=0 // pred_check
    _
  $region39: #{lstm_model_forward.1} parent=0 // pred_check_branch
    %1700 = sbr.rel (0) target = $region41
  $region40: #{lstm_model_forward.1} parent=0 // pred_region
    _
  $region41: #{lstm_model_forward.1} parent=0 // pred_fallthru
    _

</llo_original>
